<compile_context>
chip_gen: v5e
topology: v5e:2x2
jax: 0.10.0
libtpu: 0.0.40
codegen_flags: <defaults>
</compile_context>

<pallas_src>
import functools

import jax
import jax.numpy as jnp
from jax import lax
from jax.experimental import pallas as pl
from jax.experimental.pallas import tpu as pltpu

LANE = 128       # pad all feature dims to multiples of the TPU lane width
TILE_E = 512     # edges per grid step (512 amortizes the ~0.35us/step overhead)
NUM_SPLITS = 2   # leading "parallel" axis -> v7x megacore; a serial loop elsewhere


def _round_up(x, m):
    return (x + m - 1) // m * m


def _pad2(x, rows, cols):
    return jnp.pad(x, ((0, rows - x.shape[0]), (0, cols - x.shape[1])))


def _nbytes(shape, dtype):
    n = 1
    for d in shape:
        n *= int(d)
    return n * jnp.dtype(dtype).itemsize


# --------------------- edge block + receiver segment-sum kernel ---------------------
def _edge_block_kernel(e_ref, rids_ref, sids_ref, nodes_ref,
                       we_ref, wr_ref, ws_ref, be_ref,
                       eout_ref, agg_ref,
                       nr_ref, ns_ref, *, matmul_dtype):
    """Grid = (NUM_SPLITS, steps_per_split); one step = one TILE_E edge tile.

    i == 0     : prologue — project resident nodes through W_r / W_s (idempotent,
                 once per split) and zero this split's agg accumulator block.
    every step : e' = relu(e@We + oh_r^T@(nodes@Wr) + oh_s^T@(nodes@Ws) + b_e_eff)
                 agg += oh_r @ e'            (receiver segment-sum on the MXU)
    A single lane-dense (N_pad, TILE_E) one-hot per id stream serves both the
    gather (contract its node dim, i.e. transposed lhs) and the scatter.
    Padded edges carry sentinel id -1 -> all-zero one-hot columns.
    Globals are already folded into b_e_eff by the wrapper.
    """
    i = pl.program_id(1)
    n_pad = nodes_ref.shape[0]
    t_e = e_ref.shape[0]

    # ---- one-time-per-split prologue (node projections + accumulator init) ----
    @pl.when(i == 0)
    def _prologue():
        nodes = nodes_ref[...]
        nr_ref[...] = jnp.dot(nodes, wr_ref[...],
                              preferred_element_type=jnp.float32).astype(nr_ref.dtype)
        ns_ref[...] = jnp.dot(nodes, ws_ref[...],
                              preferred_element_type=jnp.float32).astype(ns_ref.dtype)
        agg_ref[...] = jnp.zeros_like(agg_ref)

    # ---- lane-dense (N_pad, TILE_E) one-hots, built directly in matmul_dtype ----
    node_iota = lax.broadcasted_iota(jnp.int32, (n_pad, t_e), 0)
    one = jnp.ones((), dtype=matmul_dtype)
    zero = jnp.zeros((), dtype=matmul_dtype)
    oh_recv = jnp.where(node_iota == rids_ref[...], one, zero)
    oh_send = jnp.where(node_iota == sids_ref[...], one, zero)

    # ---- edge block on this tile ----
    gather_dims = (((0,), (0,)), ((), ()))      # contract the node dim of the one-hot
    acc = jnp.dot(e_ref[...], we_ref[...], preferred_element_type=jnp.float32)
    acc += lax.dot_general(oh_recv, nr_ref[...], gather_dims,
                           preferred_element_type=jnp.float32)
    acc += lax.dot_general(oh_send, ns_ref[...], gather_dims,
                           preferred_element_type=jnp.float32)
    acc += be_ref[...]                          # (1, He) broadcast; globals folded in
    e_out = jnp.maximum(acc, 0.0)               # f32 elementwise (v5e VPU has no bf16)
    e_out_mm = e_out.astype(matmul_dtype)
    eout_ref[...] = e_out_mm.astype(eout_ref.dtype)   # bf16 writeback on perf path
    # NOTE: padded edge rows hold relu(b_e_eff); they never reach agg (their
    # one-hot columns are all zero) and are sliced off before returning.

    # ---- receiver segment-sum contribution of this tile (same one-hot reused) ----
    agg_ref[...] += jnp.dot(oh_recv, e_out_mm, preferred_element_type=jnp.float32)


# ------------------------------- node block kernel -------------------------------
def _node_block_kernel(agg_ref, nodes_ref, wa_ref, wn_ref, bn_ref, nout_ref,
                       *, matmul_dtype):
    """Single-block epilogue: combine per-split agg partials, apply the node block."""
    agg = agg_ref[0]
    for c in range(1, agg_ref.shape[0]):        # static tiny unroll over NUM_SPLITS
        agg = agg + agg_ref[c]
    nacc = jnp.dot(agg.astype(matmul_dtype), wa_ref[...],
                   preferred_element_type=jnp.float32)
    nacc += jnp.dot(nodes_ref[...], wn_ref[...], preferred_element_type=jnp.float32)
    nacc += bn_ref[...]
    nout_ref[...] = jnp.maximum(nacc, 0.0).astype(nout_ref.dtype)


# ------------------------------------ wrapper ------------------------------------
def graph_network(graph, params, *, matmul_dtype=jnp.bfloat16):
    """forward: node_block(edge_block(graph)) — returns updated graph dict."""
    nodes, edges, g = graph["nodes"], graph["edges"], graph["globals"]
    senders = graph["senders"].astype(jnp.int32)
    receivers = graph["receivers"].astype(jnp.int32)
    N, Dn = nodes.shape
    E, De = edges.shape
    pe, pn = params["edge"], params["node"]
    He = pe["W_e"].shape[1]
    Hn = pn["W_a"].shape[1]

    # ---- lane-dense padding (zero-pad => math unchanged) ----
    # TODO(synk): pad He/Hn to multiples of 256 on v6e/v7x when hidden sizes >= 128.
    N_pad = _round_up(N, 16)                 # sublane-friendly for f32 and bf16
    E_pad = _round_up(E, NUM_SPLITS * TILE_E)
    Dn_p, De_p = _round_up(Dn, LANE), _round_up(De, LANE)
    He_p, Hn_p = _round_up(He, LANE), _round_up(Hn, LANE)
    steps_per_split = E_pad // (NUM_SPLITS * TILE_E)

    nodes_p = _pad2(nodes, N_pad, Dn_p).astype(matmul_dtype)
    edges_p = _pad2(edges, E_pad, De_p).astype(matmul_dtype)

    # fold globals into the biases once per forward pass (tiny (1,Dg)@(Dg,H))
    b_e = _pad2((pe["b"] + g @ pe["W_g"]).astype(jnp.float32), 1, He_p)
    b_n = _pad2((pn["b"] + g @ pn["W_g"]).astype(jnp.float32), 1, Hn_p)

    W_e = _pad2(pe["W_e"], De_p, He_p).astype(matmul_dtype)
    W_r = _pad2(pe["W_r"], Dn_p, He_p).astype(matmul_dtype)
    W_s = _pad2(pe["W_s"], Dn_p, He_p).astype(matmul_dtype)
    W_a = _pad2(pn["W_a"], He_p, Hn_p).astype(matmul_dtype)
    W_n = _pad2(pn["W_n"], Dn_p, Hn_p).astype(matmul_dtype)

    # padded edges get sentinel id -1 -> their one-hot columns are all zero
    def pad_ids(ids):
        return jnp.full((1, E_pad), -1, jnp.int32).at[0, :E].set(ids)

    recv_row, send_row = pad_ids(receivers), pad_ids(senders)

    # explicit VMEM budget from the actual working set (x2 for double buffering),
    # never below the 32 MiB default scoped limit, capped under v7x's 64 MiB.
    ws = 2 * (_nbytes((TILE_E, De_p), matmul_dtype)          # edges tile
              + 2 * _nbytes((1, TILE_E), jnp.int32)          # id rows
              + _nbytes((TILE_E, He_p), matmul_dtype)        # edges_out tile
              + _nbytes((N_pad, He_p), jnp.float32)          # agg partial block
              + _nbytes((N_pad, Dn_p), matmul_dtype)         # nodes (resident)
              + _nbytes((De_p, He_p), matmul_dtype)          # W_e
              + 2 * _nbytes((Dn_p, He_p), matmul_dtype)      # W_r, W_s
              + _nbytes((1, He_p), jnp.float32)) \
         + 2 * _nbytes((N_pad, He_p), matmul_dtype)          # nr/ns scratch
    vmem_limit = int(min(max(32 << 20, 2 * ws), 60 << 20))

    edge_kernel = functools.partial(_edge_block_kernel, matmul_dtype=matmul_dtype)
    grid_spec = pltpu.PrefetchScalarGridSpec(
        num_scalar_prefetch=0,
        grid=(NUM_SPLITS, steps_per_split),
        in_specs=[
            pl.BlockSpec((TILE_E, De_p), lambda c, i: (c * steps_per_split + i, 0)),
            pl.BlockSpec((1, TILE_E),    lambda c, i: (0, c * steps_per_split + i)),
            pl.BlockSpec((1, TILE_E),    lambda c, i: (0, c * steps_per_split + i)),
            pl.BlockSpec((N_pad, Dn_p),  lambda c, i: (0, 0)),   # nodes (resident)
            pl.BlockSpec((De_p, He_p),   lambda c, i: (0, 0)),   # W_e
            pl.BlockSpec((Dn_p, He_p),   lambda c, i: (0, 0)),   # W_r
            pl.BlockSpec((Dn_p, He_p),   lambda c, i: (0, 0)),   # W_s
            pl.BlockSpec((1, He_p),      lambda c, i: (0, 0)),   # b_e_eff
        ],
        out_specs=(
            pl.BlockSpec((TILE_E, He_p), lambda c, i: (c * steps_per_split + i, 0)),
            pl.BlockSpec((None, N_pad, He_p), lambda c, i: (c, 0, 0)),  # agg partials
        ),
        scratch_shapes=[
            pltpu.VMEM((N_pad, He_p), matmul_dtype),   # nodes @ W_r
            pltpu.VMEM((N_pad, He_p), matmul_dtype),   # nodes @ W_s
        ],
    )

    e_out_p, agg_partials = pl.pallas_call(
        edge_kernel,
        out_shape=(jax.ShapeDtypeStruct((E_pad, He_p), matmul_dtype),
                   jax.ShapeDtypeStruct((NUM_SPLITS, N_pad, He_p), jnp.float32)),
        grid_spec=grid_spec,
        compiler_params=pltpu.CompilerParams(
            dimension_semantics=("parallel", "arbitrary"),
            vmem_limit_bytes=vmem_limit),
    )(edges_p, recv_row, send_row, nodes_p, W_e, W_r, W_s, b_e)

    # tiny single-block node-block epilogue (combines the per-split agg partials)
    node_kernel = functools.partial(_node_block_kernel, matmul_dtype=matmul_dtype)
    n_out_p = pl.pallas_call(
        node_kernel,
        out_shape=jax.ShapeDtypeStruct((N_pad, Hn_p), jnp.float32),
    )(agg_partials, nodes_p, W_a, W_n, b_n)

    # edges come back in matmul_dtype (bf16 on the perf path) — intended contract.
    return dict(graph, edges=e_out_p[:E, :He], nodes=n_out_p[:N, :Hn])


# --------------------------------- parameter init ---------------------------------
def init_params(key, dn, de, dg, h_edge, h_node):
    ks = jax.random.split(key, 9)
    s = 0.1
    edge = {
        "W_e": s * jax.random.normal(ks[0], (de, h_edge), jnp.float32),
        "W_r": s * jax.random.normal(ks[1], (dn, h_edge), jnp.float32),
        "W_s": s * jax.random.normal(ks[2], (dn, h_edge), jnp.float32),
        "W_g": s * jax.random.normal(ks[3], (dg, h_edge), jnp.float32),
        "b":   s * jax.random.normal(ks[4], (1, h_edge), jnp.float32),
    }
    node = {
        "W_a": s * jax.random.normal(ks[5], (h_edge, h_node), jnp.float32),
        "W_n": s * jax.random.normal(ks[6], (dn, h_node), jnp.float32),
        "W_g": s * jax.random.normal(ks[7], (dg, h_node), jnp.float32),
        "b":   s * jax.random.normal(ks[8], (1, h_node), jnp.float32),
    }
    return {"edge": edge, "node": node}


# -------------------------------- pure-JAX reference -------------------------------
def reference(graph, params):
    e, n, g = graph["edges"], graph["nodes"], graph["globals"]
    snd, rcv = graph["senders"], graph["receivers"]
    pe = params["edge"]
    e_in = jnp.concatenate(
        [e, n[rcv], n[snd], jnp.broadcast_to(g, (e.shape[0], g.shape[1]))], axis=-1)
    W = jnp.concatenate([pe["W_e"], pe["W_r"], pe["W_s"], pe["W_g"]], axis=0)
    e_out = jax.nn.relu(e_in @ W + pe["b"])
    pn = params["node"]
    agg = jax.ops.segment_sum(e_out, rcv, num_segments=n.shape[0])
    n_in = jnp.concatenate(
        [agg, n, jnp.broadcast_to(g, (n.shape[0], g.shape[1]))], axis=-1)
    Wn = jnp.concatenate([pn["W_a"], pn["W_n"], pn["W_g"]], axis=0)
    n_out = jax.nn.relu(n_in @ Wn + pn["b"])
    return e_out, n_out


# -------------------------------------- main ---------------------------------------
if __name__ == "__main__":
    key = jax.random.PRNGKey(0)
    k_n, k_e, k_g, k_s, k_r, k_p = jax.random.split(key, 6)

    N, E, Dn, De, Dg = 8, 16, 16, 8, 4
    H_EDGE, H_NODE = 32, 32

    graph = {
        "nodes": jax.random.normal(k_n, (N, Dn), jnp.float32),
        "edges": jax.random.normal(k_e, (E, De), jnp.float32),
        "globals": jax.random.normal(k_g, (1, Dg), jnp.float32),
        "senders": jax.random.randint(k_s, (E,), 0, N, jnp.int32),
        "receivers": jax.random.randint(k_r, (E,), 0, N, jnp.int32),
    }
    params = init_params(k_p, Dn, De, Dg, H_EDGE, H_NODE)

    e_ref, n_ref = reference(graph, params)

    # f32 MXU path: exactness check against the reference.
    out_f32 = graph_network(graph, params, matmul_dtype=jnp.float32)
    jax.block_until_ready(out_f32)
    assert jnp.allclose(out_f32["edges"], e_ref, atol=1e-4, rtol=1e-4)
    assert jnp.allclose(out_f32["nodes"], n_ref, atol=1e-4, rtol=1e-4)

    # bf16 MXU path (perf path: bf16 operands + bf16 edges_out writeback,
    # f32 accumulation and f32 elementwise).
    out_bf16 = graph_network(graph, params, matmul_dtype=jnp.bfloat16)
    jax.block_until_ready(out_bf16)
    assert jnp.allclose(out_bf16["edges"].astype(jnp.float32), e_ref, atol=1e-1, rtol=1e-1)
    assert jnp.allclose(out_bf16["nodes"], n_ref, atol=1e-1, rtol=1e-1)

    print("KERNEL_OK")
</pallas_src>

<mosaic_0001>
module attributes {stable_mosaic.version = 11 : i64} {
  func.func @_edge_block_kernel(%arg0: i32, %arg1: i32, %arg2: memref<512x128xf32, #tpu.memory_space<vmem>>, %arg3: memref<1x512xi32, #tpu.memory_space<vmem>>, %arg4: memref<1x512xi32, #tpu.memory_space<vmem>>, %arg5: memref<16x128xf32, #tpu.memory_space<vmem>>, %arg6: memref<128x128xf32, #tpu.memory_space<vmem>>, %arg7: memref<128x128xf32, #tpu.memory_space<vmem>>, %arg8: memref<128x128xf32, #tpu.memory_space<vmem>>, %arg9: memref<1x128xf32, #tpu.memory_space<vmem>>, %arg10: memref<512x128xf32, #tpu.memory_space<vmem>>, %arg11: memref<1x16x128xf32, #tpu.memory_space<vmem>>, %arg12: memref<16x128xf32, #tpu.memory_space<vmem>>, %arg13: memref<16x128xf32, #tpu.memory_space<vmem>>) attributes {dimension_semantics = [#tpu.dimension_semantics<parallel>, #tpu.dimension_semantics<arbitrary>], iteration_bounds = array<i64: 2, 1>, scalar_prefetch = 0 : i64, scratch_operands = 2 : i64, tpu.core_type = #tpu.core_type<tc>, window_params = [{transform_indices = @transform_0, window_bounds = array<i64: 512, 128>}, {transform_indices = @transform_1, window_bounds = array<i64: 1, 512>}, {transform_indices = @transform_2, window_bounds = array<i64: 1, 512>}, {pipeline_mode = #tpu.pipeline_mode<synchronous>, transform_indices = @transform_3, window_bounds = array<i64: 16, 128>}, {pipeline_mode = #tpu.pipeline_mode<synchronous>, transform_indices = @transform_4, window_bounds = array<i64: 128, 128>}, {pipeline_mode = #tpu.pipeline_mode<synchronous>, transform_indices = @transform_5, window_bounds = array<i64: 128, 128>}, {pipeline_mode = #tpu.pipeline_mode<synchronous>, transform_indices = @transform_6, window_bounds = array<i64: 128, 128>}, {pipeline_mode = #tpu.pipeline_mode<synchronous>, transform_indices = @transform_7, window_bounds = array<i64: 1, 128>}, {transform_indices = @transform_8, window_bounds = array<i64: 512, 128>}, {transform_indices = @transform_9, window_bounds = array<i64: 1, 16, 128>}]} {
    %c0_i32 = arith.constant 0 : i32
    %0 = arith.cmpi eq, %arg1, %c0_i32 : i32
    %1 = arith.extui %0 : i1 to i32
    %c0_i32_0 = arith.constant 0 : i32
    %2 = arith.cmpi ne, %1, %c0_i32_0 : i32
    scf.if %2 {
      %c0_30 = arith.constant 0 : index
      %c0_31 = arith.constant 0 : index
      %38 = vector.load %arg5[%c0_30, %c0_31] : memref<16x128xf32, #tpu.memory_space<vmem>>, vector<16x128xf32>
      %c0_32 = arith.constant 0 : index
      %c0_33 = arith.constant 0 : index
      %39 = vector.load %arg7[%c0_32, %c0_33] : memref<128x128xf32, #tpu.memory_space<vmem>>, vector<128x128xf32>
      %cst_34 = arith.constant dense<0.000000e+00> : vector<16x128xf32>
      %40 = tpu.matmul %38, %39, %cst_34 {dimension_numbers = #tpu.dot_dimension_numbers<[1], [0], [0], [1], [0, 0, 1, 1], [], []>} : vector<16x128xf32>, vector<128x128xf32>, vector<16x128xf32> -> vector<16x128xf32>
      %c0_35 = arith.constant 0 : index
      %c0_36 = arith.constant 0 : index
      %41 = vector.load %arg12[%c0_35, %c0_36] : memref<16x128xf32, #tpu.memory_space<vmem>>, vector<16x128xf32>
      tpu.vector_store %arg12[%c0_35, %c0_36], %40 {strides = array<i32>} : memref<16x128xf32, #tpu.memory_space<vmem>>, vector<16x128xf32>,
      %c0_37 = arith.constant 0 : index
      %c0_38 = arith.constant 0 : index
      %42 = vector.load %arg8[%c0_37, %c0_38] : memref<128x128xf32, #tpu.memory_space<vmem>>, vector<128x128xf32>
      %cst_39 = arith.constant dense<0.000000e+00> : vector<16x128xf32>
      %43 = tpu.matmul %38, %42, %cst_39 {dimension_numbers = #tpu.dot_dimension_numbers<[1], [0], [0], [1], [0, 0, 1, 1], [], []>} : vector<16x128xf32>, vector<128x128xf32>, vector<16x128xf32> -> vector<16x128xf32>
      %c0_40 = arith.constant 0 : index
      %c0_41 = arith.constant 0 : index
      %44 = vector.load %arg13[%c0_40, %c0_41] : memref<16x128xf32, #tpu.memory_space<vmem>>, vector<16x128xf32>
      tpu.vector_store %arg13[%c0_40, %c0_41], %43 {strides = array<i32>} : memref<16x128xf32, #tpu.memory_space<vmem>>, vector<16x128xf32>,
      %cst_42 = arith.constant 0.000000e+00 : f32
      %45 = vector.broadcast %cst_42 : f32 to vector<16x128xf32>
      %c0_43 = arith.constant 0 : index
      %c0_44 = arith.constant 0 : index
      %c0_45 = arith.constant 0 : index
      %46 = vector.load %arg11[%c0_43, %c0_44, %c0_45] : memref<1x16x128xf32, #tpu.memory_space<vmem>>, vector<1x16x128xf32>
      %47 = vector.shape_cast %46 : vector<1x16x128xf32> to vector<16x128xf32>
      %48 = vector.shape_cast %45 : vector<16x128xf32> to vector<1x16x128xf32>
      tpu.vector_store %arg11[%c0_43, %c0_44, %c0_45], %48 {strides = array<i32>} : memref<1x16x128xf32, #tpu.memory_space<vmem>>, vector<1x16x128xf32>,
    } else {
    }
    %3 = tpu.iota {dimensions = array<i32: 0>} : vector<16x512xi32>
    %c0 = arith.constant 0 : index
    %c0_1 = arith.constant 0 : index
    %4 = vector.load %arg3[%c0, %c0_1] : memref<1x512xi32, #tpu.memory_space<vmem>>, vector<1x512xi32>
    %5 = vector.broadcast %4 : vector<1x512xi32> to vector<16x512xi32>
    %6 = arith.cmpi eq, %3, %5 : vector<16x512xi32>
    %cst = arith.constant 1.000000e+00 : f32
    %cst_2 = arith.constant 0.000000e+00 : f32
    %7 = vector.broadcast %cst : f32 to vector<16x512xf32>
    %8 = vector.broadcast %cst_2 : f32 to vector<16x512xf32>
    %9 = arith.select %6, %7, %8 : vector<16x512xi1>, vector<16x512xf32>
    %c0_3 = arith.constant 0 : index
    %c0_4 = arith.constant 0 : index
    %10 = vector.load %arg4[%c0_3, %c0_4] : memref<1x512xi32, #tpu.memory_space<vmem>>, vector<1x512xi32>
    %11 = vector.broadcast %10 : vector<1x512xi32> to vector<16x512xi32>
    %12 = arith.cmpi eq, %3, %11 : vector<16x512xi32>
    %cst_5 = arith.constant 1.000000e+00 : f32
    %cst_6 = arith.constant 0.000000e+00 : f32
    %13 = vector.broadcast %cst_5 : f32 to vector<16x512xf32>
    %14 = vector.broadcast %cst_6 : f32 to vector<16x512xf32>
    %15 = arith.select %12, %13, %14 : vector<16x512xi1>, vector<16x512xf32>
    %c0_7 = arith.constant 0 : index
    %c0_8 = arith.constant 0 : index
    %16 = vector.load %arg2[%c0_7, %c0_8] : memref<512x128xf32, #tpu.memory_space<vmem>>, vector<512x128xf32>
    %c0_9 = arith.constant 0 : index
    %c0_10 = arith.constant 0 : index
    %17 = vector.load %arg6[%c0_9, %c0_10] : memref<128x128xf32, #tpu.memory_space<vmem>>, vector<128x128xf32>
    %cst_11 = arith.constant dense<0.000000e+00> : vector<512x128xf32>
    %18 = tpu.matmul %16, %17, %cst_11 {dimension_numbers = #tpu.dot_dimension_numbers<[1], [0], [0], [1], [0, 0, 1, 1], [], []>} : vector<512x128xf32>, vector<128x128xf32>, vector<512x128xf32> -> vector<512x128xf32>
    %c0_12 = arith.constant 0 : index
    %c0_13 = arith.constant 0 : index
    %19 = vector.load %arg12[%c0_12, %c0_13] : memref<16x128xf32, #tpu.memory_space<vmem>>, vector<16x128xf32>
    %cst_14 = arith.constant dense<0.000000e+00> : vector<512x128xf32>
    %20 = tpu.matmul %9, %19, %cst_14 {dimension_numbers = #tpu.dot_dimension_numbers<[0], [0], [1], [1], [0, 1, 1, 1], [], []>} : vector<16x512xf32>, vector<16x128xf32>, vector<512x128xf32> -> vector<512x128xf32>
    %21 = arith.addf %18, %20 : vector<512x128xf32>
    %c0_15 = arith.constant 0 : index
    %c0_16 = arith.constant 0 : index
    %22 = vector.load %arg13[%c0_15, %c0_16] : memref<16x128xf32, #tpu.memory_space<vmem>>, vector<16x128xf32>
    %cst_17 = arith.constant dense<0.000000e+00> : vector<512x128xf32>
    %23 = tpu.matmul %15, %22, %cst_17 {dimension_numbers = #tpu.dot_dimension_numbers<[0], [0], [1], [1], [0, 1, 1, 1], [], []>} : vector<16x512xf32>, vector<16x128xf32>, vector<512x128xf32> -> vector<512x128xf32>
    %24 = arith.addf %21, %23 : vector<512x128xf32>
    %c0_18 = arith.constant 0 : index
    %c0_19 = arith.constant 0 : index
    %25 = vector.load %arg9[%c0_18, %c0_19] : memref<1x128xf32, #tpu.memory_space<vmem>>, vector<1x128xf32>
    %26 = vector.broadcast %25 : vector<1x128xf32> to vector<512x128xf32>
    %27 = arith.addf %24, %26 : vector<512x128xf32>
    %cst_20 = arith.constant 0.000000e+00 : f32
    %28 = vector.broadcast %cst_20 : f32 to vector<512x128xf32>
    %29 = arith.maximumf %27, %28 : vector<512x128xf32>
    %c0_21 = arith.constant 0 : index
    %c0_22 = arith.constant 0 : index
    %30 = vector.load %arg10[%c0_21, %c0_22] : memref<512x128xf32, #tpu.memory_space<vmem>>, vector<512x128xf32>
    tpu.vector_store %arg10[%c0_21, %c0_22], %29 {strides = array<i32>} : memref<512x128xf32, #tpu.memory_space<vmem>>, vector<512x128xf32>,
    %c0_23 = arith.constant 0 : index
    %c0_24 = arith.constant 0 : index
    %c0_25 = arith.constant 0 : index
    %31 = vector.load %arg11[%c0_23, %c0_24, %c0_25] : memref<1x16x128xf32, #tpu.memory_space<vmem>>, vector<1x16x128xf32>
    %32 = vector.shape_cast %31 : vector<1x16x128xf32> to vector<16x128xf32>
    %cst_26 = arith.constant dense<0.000000e+00> : vector<16x128xf32>
    %33 = tpu.matmul %9, %29, %cst_26 {dimension_numbers = #tpu.dot_dimension_numbers<[1], [0], [0], [1], [0, 0, 1, 1], [], []>} : vector<16x512xf32>, vector<512x128xf32>, vector<16x128xf32> -> vector<16x128xf32>
    %34 = arith.addf %32, %33 : vector<16x128xf32>
    %c0_27 = arith.constant 0 : index
    %c0_28 = arith.constant 0 : index
    %c0_29 = arith.constant 0 : index
    %35 = vector.load %arg11[%c0_27, %c0_28, %c0_29] : memref<1x16x128xf32, #tpu.memory_space<vmem>>, vector<1x16x128xf32>
    %36 = vector.shape_cast %35 : vector<1x16x128xf32> to vector<16x128xf32>
    %37 = vector.shape_cast %34 : vector<16x128xf32> to vector<1x16x128xf32>
    tpu.vector_store %arg11[%c0_27, %c0_28, %c0_29], %37 {strides = array<i32>} : memref<1x16x128xf32, #tpu.memory_space<vmem>>, vector<1x16x128xf32>,
    return
  }
  func.func @transform_0(%arg0: i32, %arg1: i32) -> (i32, i32) {
    %c1_i32 = arith.constant 1 : i32
    %0 = arith.muli %arg0, %c1_i32 : i32
    %1 = arith.addi %0, %arg1 : i32
    %c0_i32 = arith.constant 0 : i32
    %c0_i32_0 = arith.constant 0 : i32
    return %1, %c0_i32 : i32, i32
  }
  func.func @transform_1(%arg0: i32, %arg1: i32) -> (i32, i32) {
    %c1_i32 = arith.constant 1 : i32
    %0 = arith.muli %arg0, %c1_i32 : i32
    %1 = arith.addi %0, %arg1 : i32
    %c0_i32 = arith.constant 0 : i32
    %c0_i32_0 = arith.constant 0 : i32
    return %c0_i32, %1 : i32, i32
  }
  func.func @transform_2(%arg0: i32, %arg1: i32) -> (i32, i32) {
    %c1_i32 = arith.constant 1 : i32
    %0 = arith.muli %arg0, %c1_i32 : i32
    %1 = arith.addi %0, %arg1 : i32
    %c0_i32 = arith.constant 0 : i32
    %c0_i32_0 = arith.constant 0 : i32
    return %c0_i32, %1 : i32, i32
  }
  func.func @transform_3(%arg0: i32, %arg1: i32) -> (i32, i32) {
    %c0_i32 = arith.constant 0 : i32
    %c0_i32_0 = arith.constant 0 : i32
    %c0_i32_1 = arith.constant 0 : i32
    return %c0_i32, %c0_i32_0 : i32, i32
  }
  func.func @transform_4(%arg0: i32, %arg1: i32) -> (i32, i32) {
    %c0_i32 = arith.constant 0 : i32
    %c0_i32_0 = arith.constant 0 : i32
    %c0_i32_1 = arith.constant 0 : i32
    return %c0_i32, %c0_i32_0 : i32, i32
  }
  func.func @transform_5(%arg0: i32, %arg1: i32) -> (i32, i32) {
    %c0_i32 = arith.constant 0 : i32
    %c0_i32_0 = arith.constant 0 : i32
    %c0_i32_1 = arith.constant 0 : i32
    return %c0_i32, %c0_i32_0 : i32, i32
  }
  func.func @transform_6(%arg0: i32, %arg1: i32) -> (i32, i32) {
    %c0_i32 = arith.constant 0 : i32
    %c0_i32_0 = arith.constant 0 : i32
    %c0_i32_1 = arith.constant 0 : i32
    return %c0_i32, %c0_i32_0 : i32, i32
  }
  func.func @transform_7(%arg0: i32, %arg1: i32) -> (i32, i32) {
    %c0_i32 = arith.constant 0 : i32
    %c0_i32_0 = arith.constant 0 : i32
    %c0_i32_1 = arith.constant 0 : i32
    return %c0_i32, %c0_i32_0 : i32, i32
  }
  func.func @transform_8(%arg0: i32, %arg1: i32) -> (i32, i32) {
    %c1_i32 = arith.constant 1 : i32
    %0 = arith.muli %arg0, %c1_i32 : i32
    %1 = arith.addi %0, %arg1 : i32
    %c0_i32 = arith.constant 0 : i32
    %c0_i32_0 = arith.constant 0 : i32
    return %1, %c0_i32 : i32, i32
  }
  func.func @transform_9(%arg0: i32, %arg1: i32) -> (i32, i32, i32) {
    %c0_i32 = arith.constant 0 : i32
    %c0_i32_0 = arith.constant 0 : i32
    %c0_i32_1 = arith.constant 0 : i32
    return %arg0, %c0_i32, %c0_i32_0 : i32, i32, i32
  }
}

</mosaic_0001>

<llo_original>
// kernel: tpu_custom_call.1
$region0: #{tpu_custom_call.1}
  #allocation0 [shape = 'u32[]', space=smem, size = 0x4, offset = 0x4, fixed_abs, tag = 'smem constant byte address 0x4 - core index']
  #allocation1 [shape = 'u32[72,128]{1,0:T(1,128)}', space=vmem, size = 0x9000, scoped, tag = 'internal scratch']
  #allocation2 [shape = 'f32[16,128]{1,0:T(8,128)}', space=vmem, size = 0x2000, scoped, tag = 'scratch operand']
  #allocation3 [shape = 'f32[16,128]{1,0:T(8,128)}', space=vmem, size = 0x2000, scoped, tag = 'scratch operand']
  %s0 = inlined_call_operand.hbm [shape: f32[1024,128], index: 0, kind: input, shape index: {}]
  %s1 = inlined_call_operand.hbm [shape: s32[1,1024], index: 1, kind: input, shape index: {}]
  %s2 = inlined_call_operand.hbm [shape: s32[1,1024], index: 2, kind: input, shape index: {}]
  %s3 = inlined_call_operand.hbm [shape: f32[16,128], index: 3, kind: input, shape index: {}]
  %s4 = inlined_call_operand.hbm [shape: f32[128,128], index: 4, kind: input, shape index: {}]
  %s5 = inlined_call_operand.hbm [shape: f32[128,128], index: 5, kind: input, shape index: {}]
  %s6 = inlined_call_operand.hbm [shape: f32[128,128], index: 6, kind: input, shape index: {}]
  %s7 = inlined_call_operand.vmem [shape: f32[1,128], index: 7, kind: input, shape index: {}]
  %s8 = inlined_call_operand.hbm [shape: f32[1024,128], index: 8, kind: output, shape index: {0}]
  %s9 = inlined_call_operand.hbm [shape: f32[2,16,128], index: 9, kind: output, shape index: {1}]
  %10 = xla_tuple %s8, %s9
  %s11 = sld [smem:[#allocation0]]
  $region105: #{tpu_custom_call.1} parent=0
    _
  %s13 = ssub.s32 1, %s11
  %s14 = scalar_select 0, %s13, %s11
  $region1: #{tpu_custom_call.1} parent=0
    #allocation4 [shape = 'u8[524288]{0}', space=vmem, size = 0x80000, scoped, tag = 'input window, operand 0']
    #allocation5 [shape = 's32[2]{0}', space=sflag, size = 0x8, scoped, tag = 'scoped memory for tpu_custom_call.1']
    #allocation6 [shape = 's32[2]{0}', space=sflag, size = 0x8, scoped, tag = 'scoped memory for tpu_custom_call.1']
    #allocation7 [shape = 'u8[4096]{0}', space=vmem, size = 0x1000, scoped, tag = 'input window, operand 1']
    #allocation8 [shape = 's32[2]{0}', space=sflag, size = 0x8, scoped, tag = 'scoped memory for tpu_custom_call.1']
    #allocation9 [shape = 'u8[4096]{0}', space=vmem, size = 0x1000, scoped, tag = 'input window, operand 2']
    #allocation10 [shape = 'u8[8192]{0}', space=vmem, size = 0x2000, scoped, tag = 'input window, operand 3, single buffered']
    #allocation11 [shape = 's32[1]{0}', space=sflag, size = 0x4, scoped, tag = 'scoped memory for tpu_custom_call.1']
    #allocation12 [shape = 'u8[65536]{0}', space=vmem, size = 0x10000, scoped, tag = 'input window, operand 4, single buffered']
    #allocation13 [shape = 'u8[65536]{0}', space=vmem, size = 0x10000, scoped, tag = 'input window, operand 5, single buffered']
    #allocation14 [shape = 's32[1]{0}', space=sflag, size = 0x4, scoped, tag = 'scoped memory for tpu_custom_call.1']
    #allocation15 [shape = 'u8[65536]{0}', space=vmem, size = 0x10000, scoped, tag = 'input window, operand 6, single buffered']
    #allocation16 [shape = 'u8[524288]{0}', space=vmem, size = 0x80000, scoped, tag = 'output window, operand 0']
    #allocation17 [shape = 'u8[16384]{0}', space=vmem, size = 0x4000, scoped, tag = 'output window, operand 1']
    #allocation18 [shape = 's32[2]{0}', space=sflag, size = 0x8, scoped, tag = 'scoped memory for tpu_custom_call.1']
    %15 = vsyncpa [#allocation5], 0
    %s16 = scalar_lea.sflag [#allocation5], 1
    %17 = vsyncpa %s16, 0
    %18 = vsyncpa [#allocation8], 0
    %s19 = scalar_lea.sflag [#allocation8], 1
    %20 = vsyncpa %s19, 0
    %21 = vsyncpa [#allocation11], 0
    %22 = vsyncpa [#allocation14], 0
    %23 = vsyncpa [#allocation6], 0
    %s24 = scalar_lea.sflag [#allocation6], 1
    %25 = vsyncpa %s24, 0
    %26 = vsyncpa [#allocation18], 0
    %s27 = scalar_lea.sflag [#allocation18], 1
    %28 = vsyncpa %s27, 0
    loop: start=0, step=1, limit=4
    $region2: #{tpu_custom_call.1} parent=1 // loop_pre_header
      _
    $region3: #{tpu_custom_call.1} parent=1 // loop_header
      %s30 = sphi 0, %s34
      %p31 = scmp.ge.s32.totalorder %s30, 4
      %s37 = sphi 0, %s49
      %s38 = sphi 0, %s45
      %s39 = sphi 0, %s37
      %s40 = sphi 0, %s38
      %s41 = sphi 0, %s39
      %s42 = sphi 0, %s40
      %s54 = sphi 0, %s56
      %s57 = sphi 0, %s54
      %s58 = sphi 0, %s57
      %s74 = sphi 0, %s58
      %s82 = sphi 0, %s84
      %s85 = sphi 0, %s82
      %s86 = sphi 0, %s85
      %s102 = sphi 0, %s86
      %s110 = sphi 0, %s112
      %s113 = sphi 0, %s110
      %s114 = sphi 0, %s113
      %s130 = sphi 0, %s114
      %s134 = sphi 0, %s134
      %s136 = sphi 0, %s134
      %s137 = sphi 0, %s136
      %s151 = sphi 0, %s137
      %s155 = sphi 0, %s155
      %s157 = sphi 0, %s155
      %s158 = sphi 0, %s157
      %s172 = sphi 0, %s158
      %s176 = sphi 0, %s176
      %s178 = sphi 0, %s176
      %s179 = sphi 0, %s178
      %s193 = sphi 0, %s179
      %s197 = sphi 0, %s197
      %s199 = sphi 0, %s197
      %s200 = sphi 0, %s199
      %s214 = sphi 0, %s200
      %s218 = sphi 0, %s218
      %s220 = sphi 0, %s218
      %s221 = sphi 0, %s220
      %s235 = sphi 0, %s221
      %s243 = sphi 0, %s245
      %s246 = sphi 0, %s243
      %s247 = sphi 0, %s246
      %s263 = sphi 0, %s247
      %s269 = sphi 0, %s271
      %s272 = sphi 0, %s269
      %s273 = sphi 0, %s272
      %s289 = sphi 0, %s273
    $region4: #{tpu_custom_call.1} parent=1 // loop_header_branch
      %33 = sbr.rel (%p31) target = $region8
    $region5: #{tpu_custom_call.1} parent=1 // loop_body
      %s35 = ssub.s32 %s30, 1
      %s36 = ssub.s32 %s30, 2
      %s43 = sadd.s32 1, %s38
      %p44 = scmp.ge.s32.totalorder %s43, 1
      %s45 = scalar_select %p44, 0, %s43
      %s46 = sadd.s32 1, %s37
      %s47 = scalar_select %p44, %s46, %s37
      %p48 = scmp.ge.s32.totalorder %s47, 2
      %s49 = scalar_select %p48, 0, %s47
      %s50 = sadd.s32 %s37, %s38
      %s51 = sadd.s32 %s49, %s45
      %s52 = ssub.s32 %s50, %s51
      %p53 = scmp.eq.s32.totalorder %s52, 0
      %s55 = sadd.s32 %s54, 1
      %s56 = scalar_select %p53, %s54, %s55
      %p59 = pneg %p53
      %p60 = scmp.eq.s32.totalorder %s30, 1
      %p61 = por %p59, %p60
      %p62 = scmp.ne.s32.totalorder %s54, %s57
      %p63 = scmp.eq.s32.totalorder %s30, 0
      %p64 = por %p62, %p63
      %p65 = scmp.ne.s32.totalorder %s54, %s57
      %p66 = scmp.eq.s32.totalorder %s35, 1
      %p67 = por %p65, %p66
      %p68 = scmp.ne.s32.totalorder %s57, %s58
      %p69 = scmp.eq.s32.totalorder %s35, 0
      %p70 = por %p68, %p69
      %p71 = scmp.ne.s32.totalorder %s57, %s58
      %p72 = scmp.eq.s32.totalorder %s36, 1
      %p73 = por %p71, %p72
      %p75 = scmp.ne.s32.totalorder %s58, %s74
      %p76 = scmp.eq.s32.totalorder %s36, 0
      %p77 = por %p75, %p76
      %s78 = sadd.s32 %s37, %s38
      %s79 = sadd.s32 %s49, %s45
      %s80 = ssub.s32 %s78, %s79
      %p81 = scmp.eq.s32.totalorder %s80, 0
      %s83 = sadd.s32 %s82, 1
      %s84 = scalar_select %p81, %s82, %s83
      %p87 = pneg %p81
      %p88 = scmp.eq.s32.totalorder %s30, 1
      %p89 = por %p87, %p88
      %p90 = scmp.ne.s32.totalorder %s82, %s85
      %p91 = scmp.eq.s32.totalorder %s30, 0
      %p92 = por %p90, %p91
      %p93 = scmp.ne.s32.totalorder %s82, %s85
      %p94 = scmp.eq.s32.totalorder %s35, 1
      %p95 = por %p93, %p94
      %p96 = scmp.ne.s32.totalorder %s85, %s86
      %p97 = scmp.eq.s32.totalorder %s35, 0
      %p98 = por %p96, %p97
      %p99 = scmp.ne.s32.totalorder %s85, %s86
      %p100 = scmp.eq.s32.totalorder %s36, 1
      %p101 = por %p99, %p100
      %p103 = scmp.ne.s32.totalorder %s86, %s102
      %p104 = scmp.eq.s32.totalorder %s36, 0
      %p105 = por %p103, %p104
      %s106 = sadd.s32 %s37, %s38
      %s107 = sadd.s32 %s49, %s45
      %s108 = ssub.s32 %s106, %s107
      %p109 = scmp.eq.s32.totalorder %s108, 0
      %s111 = sadd.s32 %s110, 1
      %s112 = scalar_select %p109, %s110, %s111
      %p115 = pneg %p109
      %p116 = scmp.eq.s32.totalorder %s30, 1
      %p117 = por %p115, %p116
      %p118 = scmp.ne.s32.totalorder %s110, %s113
      %p119 = scmp.eq.s32.totalorder %s30, 0
      %p120 = por %p118, %p119
      %p121 = scmp.ne.s32.totalorder %s110, %s113
      %p122 = scmp.eq.s32.totalorder %s35, 1
      %p123 = por %p121, %p122
      %p124 = scmp.ne.s32.totalorder %s113, %s114
      %p125 = scmp.eq.s32.totalorder %s35, 0
      %p126 = por %p124, %p125
      %p127 = scmp.ne.s32.totalorder %s113, %s114
      %p128 = scmp.eq.s32.totalorder %s36, 1
      %p129 = por %p127, %p128
      %p131 = scmp.ne.s32.totalorder %s114, %s130
      %p132 = scmp.eq.s32.totalorder %s36, 0
      %p133 = por %p131, %p132
      %s135 = sadd.s32 %s134, 1
      %p138 = scmp.eq.s32.totalorder %s30, 1
      %p139 = scmp.ne.s32.totalorder %s134, %s136
      %p140 = scmp.eq.s32.totalorder %s30, 0
      %p141 = por %p139, %p140
      %p142 = scmp.ne.s32.totalorder %s134, %s136
      %p143 = scmp.eq.s32.totalorder %s35, 1
      %p144 = por %p142, %p143
      %p145 = scmp.ne.s32.totalorder %s136, %s137
      %p146 = scmp.eq.s32.totalorder %s35, 0
      %p147 = por %p145, %p146
      %p148 = scmp.ne.s32.totalorder %s136, %s137
      %p149 = scmp.eq.s32.totalorder %s36, 1
      %p150 = por %p148, %p149
      %p152 = scmp.ne.s32.totalorder %s137, %s151
      %p153 = scmp.eq.s32.totalorder %s36, 0
      %p154 = por %p152, %p153
      %s156 = sadd.s32 %s155, 1
      %p159 = scmp.eq.s32.totalorder %s30, 1
      %p160 = scmp.ne.s32.totalorder %s155, %s157
      %p161 = scmp.eq.s32.totalorder %s30, 0
      %p162 = por %p160, %p161
      %p163 = scmp.ne.s32.totalorder %s155, %s157
      %p164 = scmp.eq.s32.totalorder %s35, 1
      %p165 = por %p163, %p164
      %p166 = scmp.ne.s32.totalorder %s157, %s158
      %p167 = scmp.eq.s32.totalorder %s35, 0
      %p168 = por %p166, %p167
      %p169 = scmp.ne.s32.totalorder %s157, %s158
      %p170 = scmp.eq.s32.totalorder %s36, 1
      %p171 = por %p169, %p170
      %p173 = scmp.ne.s32.totalorder %s158, %s172
      %p174 = scmp.eq.s32.totalorder %s36, 0
      %p175 = por %p173, %p174
      %s177 = sadd.s32 %s176, 1
      %p180 = scmp.eq.s32.totalorder %s30, 1
      %p181 = scmp.ne.s32.totalorder %s176, %s178
      %p182 = scmp.eq.s32.totalorder %s30, 0
      %p183 = por %p181, %p182
      %p184 = scmp.ne.s32.totalorder %s176, %s178
      %p185 = scmp.eq.s32.totalorder %s35, 1
      %p186 = por %p184, %p185
      %p187 = scmp.ne.s32.totalorder %s178, %s179
      %p188 = scmp.eq.s32.totalorder %s35, 0
      %p189 = por %p187, %p188
      %p190 = scmp.ne.s32.totalorder %s178, %s179
      %p191 = scmp.eq.s32.totalorder %s36, 1
      %p192 = por %p190, %p191
      %p194 = scmp.ne.s32.totalorder %s179, %s193
      %p195 = scmp.eq.s32.totalorder %s36, 0
      %p196 = por %p194, %p195
      %s198 = sadd.s32 %s197, 1
      %p201 = scmp.eq.s32.totalorder %s30, 1
      %p202 = scmp.ne.s32.totalorder %s197, %s199
      %p203 = scmp.eq.s32.totalorder %s30, 0
      %p204 = por %p202, %p203
      %p205 = scmp.ne.s32.totalorder %s197, %s199
      %p206 = scmp.eq.s32.totalorder %s35, 1
      %p207 = por %p205, %p206
      %p208 = scmp.ne.s32.totalorder %s199, %s200
      %p209 = scmp.eq.s32.totalorder %s35, 0
      %p210 = por %p208, %p209
      %p211 = scmp.ne.s32.totalorder %s199, %s200
      %p212 = scmp.eq.s32.totalorder %s36, 1
      %p213 = por %p211, %p212
      %p215 = scmp.ne.s32.totalorder %s200, %s214
      %p216 = scmp.eq.s32.totalorder %s36, 0
      %p217 = por %p215, %p216
      %s219 = sadd.s32 %s218, 1
      %p222 = scmp.eq.s32.totalorder %s30, 1
      %p223 = scmp.ne.s32.totalorder %s218, %s220
      %p224 = scmp.eq.s32.totalorder %s30, 0
      %p225 = por %p223, %p224
      %p226 = scmp.ne.s32.totalorder %s218, %s220
      %p227 = scmp.eq.s32.totalorder %s35, 1
      %p228 = por %p226, %p227
      %p229 = scmp.ne.s32.totalorder %s220, %s221
      %p230 = scmp.eq.s32.totalorder %s35, 0
      %p231 = por %p229, %p230
      %p232 = scmp.ne.s32.totalorder %s220, %s221
      %p233 = scmp.eq.s32.totalorder %s36, 1
      %p234 = por %p232, %p233
      %p236 = scmp.ne.s32.totalorder %s221, %s235
      %p237 = scmp.eq.s32.totalorder %s36, 0
      %p238 = por %p236, %p237
      %s239 = sadd.s32 %s37, %s38
      %s240 = sadd.s32 %s49, %s45
      %s241 = ssub.s32 %s239, %s240
      %p242 = scmp.eq.s32.totalorder %s241, 0
      %s244 = sadd.s32 %s243, 1
      %s245 = scalar_select %p242, %s243, %s244
      %p248 = pneg %p242
      %p249 = scmp.eq.s32.totalorder %s30, 1
      %p250 = por %p248, %p249
      %p251 = scmp.ne.s32.totalorder %s243, %s246
      %p252 = scmp.eq.s32.totalorder %s30, 0
      %p253 = por %p251, %p252
      %p254 = scmp.ne.s32.totalorder %s243, %s246
      %p255 = scmp.eq.s32.totalorder %s35, 1
      %p256 = por %p254, %p255
      %p257 = scmp.ne.s32.totalorder %s246, %s247
      %p258 = scmp.eq.s32.totalorder %s35, 0
      %p259 = por %p257, %p258
      %p260 = scmp.ne.s32.totalorder %s246, %s247
      %p261 = scmp.eq.s32.totalorder %s36, 1
      %p262 = por %p260, %p261
      %p264 = scmp.ne.s32.totalorder %s247, %s263
      %p265 = scmp.eq.s32.totalorder %s36, 0
      %p266 = por %p264, %p265
      %s267 = ssub.s32 %s37, %s49
      %p268 = scmp.eq.s32.totalorder %s267, 0
      %s270 = sadd.s32 %s269, 1
      %s271 = scalar_select %p268, %s269, %s270
      %p274 = pneg %p268
      %p275 = scmp.eq.s32.totalorder %s30, 1
      %p276 = por %p274, %p275
      %p277 = scmp.ne.s32.totalorder %s269, %s272
      %p278 = scmp.eq.s32.totalorder %s30, 0
      %p279 = por %p277, %p278
      %p280 = scmp.ne.s32.totalorder %s269, %s272
      %p281 = scmp.eq.s32.totalorder %s35, 1
      %p282 = por %p280, %p281
      %p283 = scmp.ne.s32.totalorder %s272, %s273
      %p284 = scmp.eq.s32.totalorder %s35, 0
      %p285 = por %p283, %p284
      %p286 = scmp.ne.s32.totalorder %s272, %s273
      %p287 = scmp.eq.s32.totalorder %s36, 1
      %p288 = por %p286, %p287
      %p290 = scmp.ne.s32.totalorder %s273, %s289
      %p291 = scmp.eq.s32.totalorder %s36, 0
      %p292 = por %p290, %p291
      %p293 = scmp.le.s32.totalorder 1, %s30
      %p294 = scmp.lt.s32.totalorder %s30, 3
      %p295 = pnand %p293, %p294
      %p296 = pneg %p295
      // Predicated region
      $region9: #{tpu_custom_call.1} parent=5 // pred_check
        _
      $region10: #{tpu_custom_call.1} parent=5 // pred_check_branch
        %298 = sbr.rel (%p295) target = $region12
      $region11: #{tpu_custom_call.1} parent=5 // pred_region
        %s299 = ssub.s32 %s30, 1
        // Predicated region
        $region13: #{tpu_custom_call.1} parent=11 // pred_check
          %p300 = pneg %p147
        $region14: #{tpu_custom_call.1} parent=11 // pred_check_branch
          %302 = sbr.rel (%p300) target = $region16
        $region15: #{tpu_custom_call.1} parent=11 // pred_region
          %304 = vsyncadd [#allocation11], 0
          %s305 = sshll.u32 %s3, 4
          %s306 = int_to_ptr.hbm [resolvable:$true] %s305
          %s307 = sshll.u32 [#allocation10], 4
          %s308 = int_to_ptr.vmem [resolvable:$true] %s307
          %313 = dma.hbm_to_vmem [thread:$0]  %s306, 256, %s308, [#allocation11], 128, 128, 8
        $region16: #{tpu_custom_call.1} parent=11 // pred_fallthru
          _
        // Predicated region
        $region17: #{tpu_custom_call.1} parent=11 // pred_check
          %p314 = pneg %p168
        $region18: #{tpu_custom_call.1} parent=11 // pred_check_branch
          %316 = sbr.rel (%p314) target = $region20
        $region19: #{tpu_custom_call.1} parent=11 // pred_region
          %318 = vsyncadd [#allocation11], 0
          %s319 = sshll.u32 %s4, 4
          %s320 = int_to_ptr.hbm [resolvable:$true] %s319
          %s321 = sshll.u32 [#allocation12], 4
          %s322 = int_to_ptr.vmem [resolvable:$true] %s321
          %327 = dma.hbm_to_vmem [thread:$0]  %s320, 2048, %s322, [#allocation11], 128, 128, 8
        $region20: #{tpu_custom_call.1} parent=11 // pred_fallthru
          _
        // Predicated region
        $region21: #{tpu_custom_call.1} parent=11 // pred_check
          %p328 = pneg %p189
        $region22: #{tpu_custom_call.1} parent=11 // pred_check_branch
          %330 = sbr.rel (%p328) target = $region24
        $region23: #{tpu_custom_call.1} parent=11 // pred_region
          %332 = vsyncadd [#allocation14], 0
          %s333 = sshll.u32 %s5, 4
          %s334 = int_to_ptr.hbm [resolvable:$true] %s333
          %s335 = sshll.u32 [#allocation13], 4
          %s336 = int_to_ptr.vmem [resolvable:$true] %s335
          %341 = dma.hbm_to_vmem [thread:$0]  %s334, 2048, %s336, [#allocation14], 128, 128, 8
        $region24: #{tpu_custom_call.1} parent=11 // pred_fallthru
          _
        // Predicated region
        $region25: #{tpu_custom_call.1} parent=11 // pred_check
          %p342 = pneg %p210
        $region26: #{tpu_custom_call.1} parent=11 // pred_check_branch
          %344 = sbr.rel (%p342) target = $region28
        $region27: #{tpu_custom_call.1} parent=11 // pred_region
          %346 = vsyncadd [#allocation14], 0
          %s347 = sshll.u32 %s6, 4
          %s348 = int_to_ptr.hbm [resolvable:$true] %s347
          %s349 = sshll.u32 [#allocation15], 4
          %s350 = int_to_ptr.vmem [resolvable:$true] %s349
          %355 = dma.hbm_to_vmem [thread:$0]  %s348, 2048, %s350, [#allocation14], 128, 128, 8
        $region28: #{tpu_custom_call.1} parent=11 // pred_fallthru
          _
        // Predicated region
        $region29: #{tpu_custom_call.1} parent=11 // pred_check
          %p356 = pneg %p231
        $region30: #{tpu_custom_call.1} parent=11 // pred_check_branch
          %358 = sbr.rel (%p356) target = $region32
        $region31: #{tpu_custom_call.1} parent=11 // pred_region
          _
        $region32: #{tpu_custom_call.1} parent=11 // pred_fallthru
          _
      $region12: #{tpu_custom_call.1} parent=5 // pred_fallthru
        _
      %p359 = scmp.lt.s32.totalorder %s30, 2
      // Predicated region
      $region33: #{tpu_custom_call.1} parent=5 // pred_check
        %p360 = pneg %p359
      $region34: #{tpu_custom_call.1} parent=5 // pred_check_branch
        %362 = sbr.rel (%p360) target = $region36
      $region35: #{tpu_custom_call.1} parent=5 // pred_region
        // Predicated region
        $region37: #{tpu_custom_call.1} parent=35 // pred_check
          %p363 = pneg %p64
        $region38: #{tpu_custom_call.1} parent=35 // pred_check_branch
          %365 = sbr.rel (%p363) target = $region40
        $region39: #{tpu_custom_call.1} parent=35 // pred_region
          %s366 = sand.u32 %s54, 1
          %s367 = scalar_lea.sflag [#allocation5], %s366
          %s368 = sand.u32 %s54, 1
          %s369 = smul.addr %s368, 512
          %s370 = scalar_lea.vmem [#allocation4], %s369
          %s371 = sadd.s32 %s37, %s38
          %s372 = smul.u32 64, %s371
          %374 = vsyncadd %s367, 0
          %s375 = smul.addr %s372, 8
          %s376 = scalar_lea.hbm %s0, %s375
          %s377 = sshll.u32 %s376, 4
          %s378 = int_to_ptr.hbm [resolvable:$true] %s377
          %s379 = sshll.u32 %s370, 4
          %s380 = int_to_ptr.vmem [resolvable:$true] %s379
          %385 = dma.hbm_to_vmem [thread:$0]  %s378, 8192, %s380, %s367, 128, 128, 8
        $region40: #{tpu_custom_call.1} parent=35 // pred_fallthru
          _
        // Predicated region
        $region41: #{tpu_custom_call.1} parent=35 // pred_check
          %p386 = pneg %p92
        $region42: #{tpu_custom_call.1} parent=35 // pred_check_branch
          %388 = sbr.rel (%p386) target = $region44
        $region43: #{tpu_custom_call.1} parent=35 // pred_region
          %s389 = sand.u32 %s30, 1
          %s390 = scalar_lea.sflag [#allocation8], %s389
          %s391 = sand.u32 %s82, 1
          %s392 = smul.addr %s391, 4
          %s393 = scalar_lea.vmem [#allocation7], %s392
          %s394 = sadd.s32 %s37, %s38
          %s395 = smul.u32 4, %s394
          %397 = vsyncadd %s390, 0
          %s398 = scalar_lea.hbm %s1, %s395
          %s400 = sshll.u32 %s398, 4
          %s401 = int_to_ptr.hbm [resolvable:$true] %s400
          %s402 = sshll.u32 %s393, 4
          %s403 = int_to_ptr.vmem [resolvable:$true] %s402
          %405 = dma.hbm_to_vmem [thread:$0]  %s401, 64, %s403, %s390
        $region44: #{tpu_custom_call.1} parent=35 // pred_fallthru
          _
        // Predicated region
        $region45: #{tpu_custom_call.1} parent=35 // pred_check
          %p406 = pneg %p120
        $region46: #{tpu_custom_call.1} parent=35 // pred_check_branch
          %408 = sbr.rel (%p406) target = $region48
        $region47: #{tpu_custom_call.1} parent=35 // pred_region
          %s409 = sand.u32 %s30, 1
          %s410 = scalar_lea.sflag [#allocation8], %s409
          %s411 = sand.u32 %s110, 1
          %s412 = smul.addr %s411, 4
          %s413 = scalar_lea.vmem [#allocation9], %s412
          %s414 = sadd.s32 %s37, %s38
          %s415 = smul.u32 4, %s414
          %417 = vsyncadd %s410, 0
          %s418 = scalar_lea.hbm %s2, %s415
          %s420 = sshll.u32 %s418, 4
          %s421 = int_to_ptr.hbm [resolvable:$true] %s420
          %s422 = sshll.u32 %s413, 4
          %s423 = int_to_ptr.vmem [resolvable:$true] %s422
          %425 = dma.hbm_to_vmem [thread:$0]  %s421, 64, %s423, %s410
        $region48: #{tpu_custom_call.1} parent=35 // pred_fallthru
          _
      $region36: #{tpu_custom_call.1} parent=5 // pred_fallthru
        _
      %p426 = scmp.le.s32.totalorder 1, %s30
      %p427 = scmp.lt.s32.totalorder %s30, 3
      %p428 = pnand %p426, %p427
      %p429 = pneg %p428
      // Predicated region
      $region49: #{tpu_custom_call.1} parent=5 // pred_check
        _
      $region50: #{tpu_custom_call.1} parent=5 // pred_check_branch
        %431 = sbr.rel (%p428) target = $region52
      $region51: #{tpu_custom_call.1} parent=5 // pred_region
        %s432 = ssub.s32 %s30, 1
        %s433 = sand.u32 %s57, 1
        %s434 = scalar_lea.sflag [#allocation5], %s433
        %s435 = sand.u32 %s57, 1
        %s436 = smul.addr %s435, 512
        %s437 = scalar_lea.vmem [#allocation4], %s436
        // Predicated region
        $region53: #{tpu_custom_call.1} parent=51 // pred_check
          %p438 = pneg %p70
        $region54: #{tpu_custom_call.1} parent=51 // pred_check_branch
          %440 = sbr.rel (%p438) target = $region56
        $region55: #{tpu_custom_call.1} parent=51 // pred_region
          %442 = dma.done %s434, 8192
        $region56: #{tpu_custom_call.1} parent=51 // pred_fallthru
          _
        %s443 = sand.u32 %s35, 1
        %s444 = scalar_lea.sflag [#allocation8], %s443
        %s445 = sand.u32 %s85, 1
        %s446 = smul.addr %s445, 4
        %s447 = scalar_lea.vmem [#allocation7], %s446
        // Predicated region
        $region57: #{tpu_custom_call.1} parent=51 // pred_check
          %p448 = pneg %p98
        $region58: #{tpu_custom_call.1} parent=51 // pred_check_branch
          %450 = sbr.rel (%p448) target = $region60
        $region59: #{tpu_custom_call.1} parent=51 // pred_region
          %452 = dma.done %s444, 64
        $region60: #{tpu_custom_call.1} parent=51 // pred_fallthru
          _
        %s453 = sand.u32 %s35, 1
        %s454 = scalar_lea.sflag [#allocation8], %s453
        %s455 = sand.u32 %s113, 1
        %s456 = smul.addr %s455, 4
        %s457 = scalar_lea.vmem [#allocation9], %s456
        // Predicated region
        $region61: #{tpu_custom_call.1} parent=51 // pred_check
          %p458 = pneg %p126
        $region62: #{tpu_custom_call.1} parent=51 // pred_check_branch
          %460 = sbr.rel (%p458) target = $region64
        $region63: #{tpu_custom_call.1} parent=51 // pred_region
          %462 = dma.done %s454, 64
        $region64: #{tpu_custom_call.1} parent=51 // pred_fallthru
          _
        // Predicated region
        $region65: #{tpu_custom_call.1} parent=51 // pred_check
          %p463 = pneg %p147
        $region66: #{tpu_custom_call.1} parent=51 // pred_check_branch
          %465 = sbr.rel (%p463) target = $region68
        $region67: #{tpu_custom_call.1} parent=51 // pred_region
          %467 = dma.done [#allocation11], 256
        $region68: #{tpu_custom_call.1} parent=51 // pred_fallthru
          _
        // Predicated region
        $region69: #{tpu_custom_call.1} parent=51 // pred_check
          %p468 = pneg %p168
        $region70: #{tpu_custom_call.1} parent=51 // pred_check_branch
          %470 = sbr.rel (%p468) target = $region72
        $region71: #{tpu_custom_call.1} parent=51 // pred_region
          %472 = dma.done [#allocation11], 2048
        $region72: #{tpu_custom_call.1} parent=51 // pred_fallthru
          _
        // Predicated region
        $region73: #{tpu_custom_call.1} parent=51 // pred_check
          %p473 = pneg %p189
        $region74: #{tpu_custom_call.1} parent=51 // pred_check_branch
          %475 = sbr.rel (%p473) target = $region76
        $region75: #{tpu_custom_call.1} parent=51 // pred_region
          %477 = dma.done [#allocation14], 2048
        $region76: #{tpu_custom_call.1} parent=51 // pred_fallthru
          _
        // Predicated region
        $region77: #{tpu_custom_call.1} parent=51 // pred_check
          %p478 = pneg %p210
        $region78: #{tpu_custom_call.1} parent=51 // pred_check_branch
          %480 = sbr.rel (%p478) target = $region80
        $region79: #{tpu_custom_call.1} parent=51 // pred_region
          %482 = dma.done [#allocation14], 2048
        $region80: #{tpu_custom_call.1} parent=51 // pred_fallthru
          _
        %s483 = sand.u32 %s57, 1
        %s484 = scalar_lea.sflag [#allocation5], %s483
        %s485 = sand.u32 %s57, 1
        %s486 = smul.addr %s485, 512
        %s487 = scalar_lea.vmem [#allocation4], %s486
        %p488 = pneg %p70
        %p489 = pneg %p67
        %s490 = sand.u32 %s35, 1
        %s491 = scalar_lea.sflag [#allocation8], %s490
        %s492 = sand.u32 %s85, 1
        %s493 = smul.addr %s492, 4
        %s494 = scalar_lea.vmem [#allocation7], %s493
        %p495 = pneg %p98
        %p496 = pneg %p95
        %s497 = sand.u32 %s35, 1
        %s498 = scalar_lea.sflag [#allocation8], %s497
        %s499 = sand.u32 %s113, 1
        %s500 = smul.addr %s499, 4
        %s501 = scalar_lea.vmem [#allocation9], %s500
        %p502 = pneg %p126
        %p503 = pneg %p123
        %p504 = pneg %p147
        %p505 = pneg %p144
        %p506 = pneg %p168
        %p507 = pneg %p165
        %p508 = pneg %p189
        %p509 = pneg %p186
        %p510 = pneg %p210
        %p511 = pneg %p207
        %p512 = pneg %p231
        %p513 = pneg %p228
        %p514 = pneg %p259
        %p515 = pneg %p256
        %s516 = sand.u32 %s246, 1
        %s517 = scalar_lea.sflag [#allocation6], %s516
        %s518 = sand.u32 %s246, 1
        %s519 = smul.addr %s518, 512
        %s520 = scalar_lea.vmem [#allocation16], %s519
        %p521 = pneg %p285
        %p522 = pneg %p282
        %s523 = sand.u32 %s272, 1
        %s524 = scalar_lea.sflag [#allocation18], %s523
        %s525 = sand.u32 %s272, 1
        %s526 = smul.addr %s525, 16
        %s527 = scalar_lea.vmem [#allocation17], %s526
        %s528 = sadd.s32 %s39, %s40
        %s529 = smul.u32 64, %s528
        %s530 = sadd.s32 %s39, %s40
        %s531 = smul.u32 4, %s530
        %s532 = sadd.s32 %s39, %s40
        %s533 = smul.u32 4, %s532
        %s534 = sadd.s32 %s39, %s40
        %s535 = smul.u32 64, %s534
        %p536 = scmp.eq.s32.totalorder %s40, 0
        // Predicated region
        $region81: #{tpu_custom_call.1} parent=51 // pred_check
          %p537 = pneg %p536
        $region82: #{tpu_custom_call.1} parent=51 // pred_check_branch
          %539 = sbr.rel (%p537) target = $region84
        $region83: #{tpu_custom_call.1} parent=51 // pred_region
          %v540 = vld [vmem:[#allocation10] sm:$0xff]
          %v541 = vld [vmem:[#allocation10 + $0x8] sm:$0xff]
          %v542 = vld [vmem:[#allocation13] sm:$0xff]
          %v543 = vld [vmem:[#allocation13 + $0x8] sm:$0xff]
          %v544 = vld [vmem:[#allocation13 + $0x10] sm:$0xff]
          %v545 = vld [vmem:[#allocation13 + $0x18] sm:$0xff]
          %v546 = vld [vmem:[#allocation13 + $0x20] sm:$0xff]
          %v547 = vld [vmem:[#allocation13 + $0x28] sm:$0xff]
          %v548 = vld [vmem:[#allocation13 + $0x30] sm:$0xff]
          %v549 = vld [vmem:[#allocation13 + $0x38] sm:$0xff]
          %v550 = vld [vmem:[#allocation13 + $0x40] sm:$0xff]
          %v551 = vld [vmem:[#allocation13 + $0x48] sm:$0xff]
          %v552 = vld [vmem:[#allocation13 + $0x50] sm:$0xff]
          %v553 = vld [vmem:[#allocation13 + $0x58] sm:$0xff]
          %v554 = vld [vmem:[#allocation13 + $0x60] sm:$0xff]
          %v555 = vld [vmem:[#allocation13 + $0x68] sm:$0xff]
          %v556 = vld [vmem:[#allocation13 + $0x70] sm:$0xff]
          %v557 = vld [vmem:[#allocation13 + $0x78] sm:$0xff]
          %558 = vmatpush.msra.mxu0 %v557
          %559 = vmatpush.msra.mxu0 %v556
          %560 = vmatpush.msra.mxu0 %v555
          %561 = vmatpush.msra.mxu0 %v554
          %562 = vmatpush.msra.mxu0 %v553
          %563 = vmatpush.msra.mxu0 %v552
          %564 = vmatpush.msra.mxu0 %v551
          %565 = vmatpush.msra.mxu0 %v550
          %566 = vmatpush.msra.mxu0 %v549
          %567 = vmatpush.msra.mxu0 %v548
          %568 = vmatpush.msra.mxu0 %v547
          %569 = vmatpush.msra.mxu0 %v546
          %570 = vmatpush.msra.mxu0 %v545
          %571 = vmatpush.msra.mxu0 %v544
          %572 = vmatpush.msra.mxu0 %v543
          %573 = vmatpush.msra.mxu0 %v542
          %574 = vmatmul.f32.gmra.mxu0 %v540
          %v575 = vpop.f32.mrf.mxu0
          %v576 = vadd.f32 0.0, %v575
          %577 = vmatmul.f32.gmra.mxu0 %v541
          %v578 = vpop.f32.mrf.mxu0
          %v579 = vadd.f32 0.0, %v578
          %580 = vdwg.mxu0
          %581 = vst [vmem:[#allocation2] sm:$0xff] %v576
          %582 = vst [vmem:[#allocation2 + $0x8] sm:$0xff] %v579
          %v583 = vld [vmem:[#allocation15] sm:$0xff]
          %v584 = vld [vmem:[#allocation15 + $0x8] sm:$0xff]
          %v585 = vld [vmem:[#allocation15 + $0x10] sm:$0xff]
          %v586 = vld [vmem:[#allocation15 + $0x18] sm:$0xff]
          %v587 = vld [vmem:[#allocation15 + $0x20] sm:$0xff]
          %v588 = vld [vmem:[#allocation15 + $0x28] sm:$0xff]
          %v589 = vld [vmem:[#allocation15 + $0x30] sm:$0xff]
          %v590 = vld [vmem:[#allocation15 + $0x38] sm:$0xff]
          %v591 = vld [vmem:[#allocation15 + $0x40] sm:$0xff]
          %v592 = vld [vmem:[#allocation15 + $0x48] sm:$0xff]
          %v593 = vld [vmem:[#allocation15 + $0x50] sm:$0xff]
          %v594 = vld [vmem:[#allocation15 + $0x58] sm:$0xff]
          %v595 = vld [vmem:[#allocation15 + $0x60] sm:$0xff]
          %v596 = vld [vmem:[#allocation15 + $0x68] sm:$0xff]
          %v597 = vld [vmem:[#allocation15 + $0x70] sm:$0xff]
          %v598 = vld [vmem:[#allocation15 + $0x78] sm:$0xff]
          %599 = vmatpush.msra.mxu0 %v598
          %600 = vmatpush.msra.mxu0 %v597
          %601 = vmatpush.msra.mxu0 %v596
          %602 = vmatpush.msra.mxu0 %v595
          %603 = vmatpush.msra.mxu0 %v594
          %604 = vmatpush.msra.mxu0 %v593
          %605 = vmatpush.msra.mxu0 %v592
          %606 = vmatpush.msra.mxu0 %v591
          %607 = vmatpush.msra.mxu0 %v590
          %608 = vmatpush.msra.mxu0 %v589
          %609 = vmatpush.msra.mxu0 %v588
          %610 = vmatpush.msra.mxu0 %v587
          %611 = vmatpush.msra.mxu0 %v586
          %612 = vmatpush.msra.mxu0 %v585
          %613 = vmatpush.msra.mxu0 %v584
          %614 = vmatpush.msra.mxu0 %v583
          %615 = vmatmul.f32.gmra.mxu0 %v540
          %v616 = vpop.f32.mrf.mxu0
          %v617 = vadd.f32 0.0, %v616
          %618 = vmatmul.f32.gmra.mxu0 %v541
          %v619 = vpop.f32.mrf.mxu0
          %v620 = vadd.f32 0.0, %v619
          %621 = vdwg.mxu0
          %622 = vst [vmem:[#allocation3] sm:$0xff] %v617
          %623 = vst [vmem:[#allocation3 + $0x8] sm:$0xff] %v620
          %624 = vst [vmem:[%s527] sm:$0xff] 0.0
          %625 = vst [vmem:[%s527 + $0x8] sm:$0xff] 0.0
        $region84: #{tpu_custom_call.1} parent=51 // pred_fallthru
          _
        %v626 = vlaneseq
        %v627 = vshrl.u32 %v626, 7
        %v628 = vadd.s32 %v627, 8
        %v629 = vld [vmem:[%s447] sm:$0xf]
        %v630 = vperm.slane %v629, 0
        %v631 = vperm.slane %v629, 1
        %v632 = vperm.slane %v629, 2
        %v633 = vperm.slane %v629, 3
        %vm634 = vcmp.eq.s32.totalorder %v627, %v630
        %vm635 = vcmp.eq.s32.totalorder %v627, %v631
        %vm636 = vcmp.eq.s32.totalorder %v627, %v632
        %vm637 = vcmp.eq.s32.totalorder %v627, %v633
        %vm638 = vcmp.eq.s32.totalorder %v628, %v630
        %vm639 = vcmp.eq.s32.totalorder %v628, %v631
        %vm640 = vcmp.eq.s32.totalorder %v628, %v632
        %vm641 = vcmp.eq.s32.totalorder %v628, %v633
        %v642 = vsel %vm634, 1.0, 0.0
        %v643 = vsel %vm635, 1.0, 0.0
        %v644 = vsel %vm636, 1.0, 0.0
        %v645 = vsel %vm637, 1.0, 0.0
        %v646 = vsel %vm638, 1.0, 0.0
        %v647 = vsel %vm639, 1.0, 0.0
        %v648 = vsel %vm640, 1.0, 0.0
        %v649 = vsel %vm641, 1.0, 0.0
        %v650 = vld [vmem:[%s457] sm:$0xf]
        %v651 = vperm.slane %v650, 0
        %v652 = vperm.slane %v650, 1
        %v653 = vperm.slane %v650, 2
        %v654 = vperm.slane %v650, 3
        %vm655 = vcmp.eq.s32.totalorder %v627, %v651
        %vm656 = vcmp.eq.s32.totalorder %v627, %v652
        %vm657 = vcmp.eq.s32.totalorder %v627, %v653
        %vm658 = vcmp.eq.s32.totalorder %v627, %v654
        %vm659 = vcmp.eq.s32.totalorder %v628, %v651
        %vm660 = vcmp.eq.s32.totalorder %v628, %v652
        %vm661 = vcmp.eq.s32.totalorder %v628, %v653
        %vm662 = vcmp.eq.s32.totalorder %v628, %v654
        %v663 = vsel %vm655, 1.0, 0.0
        %v664 = vsel %vm656, 1.0, 0.0
        %v665 = vsel %vm657, 1.0, 0.0
        %v666 = vsel %vm658, 1.0, 0.0
        %v667 = vsel %vm659, 1.0, 0.0
        %v668 = vsel %vm660, 1.0, 0.0
        %v669 = vsel %vm661, 1.0, 0.0
        %v670 = vsel %vm662, 1.0, 0.0
        %v671 = vld [vmem:[%s437] sm:$0xff]
        %v672 = vld [vmem:[%s437 + $0x8] sm:$0xff]
        %v673 = vld [vmem:[%s437 + $0x10] sm:$0xff]
        %v674 = vld [vmem:[%s437 + $0x18] sm:$0xff]
        %v675 = vld [vmem:[%s437 + $0x20] sm:$0xff]
        %v676 = vld [vmem:[%s437 + $0x28] sm:$0xff]
        %v677 = vld [vmem:[%s437 + $0x30] sm:$0xff]
        %v678 = vld [vmem:[%s437 + $0x38] sm:$0xff]
        %v679 = vld [vmem:[%s437 + $0x40] sm:$0xff]
        %v680 = vld [vmem:[%s437 + $0x48] sm:$0xff]
        %v681 = vld [vmem:[%s437 + $0x50] sm:$0xff]
        %v682 = vld [vmem:[%s437 + $0x58] sm:$0xff]
        %v683 = vld [vmem:[%s437 + $0x60] sm:$0xff]
        %v684 = vld [vmem:[%s437 + $0x68] sm:$0xff]
        %v685 = vld [vmem:[%s437 + $0x70] sm:$0xff]
        %v686 = vld [vmem:[%s437 + $0x78] sm:$0xff]
        %v687 = vld [vmem:[%s437 + $0x80] sm:$0xff]
        %v688 = vld [vmem:[%s437 + $0x88] sm:$0xff]
        %v689 = vld [vmem:[%s437 + $0x90] sm:$0xff]
        %v690 = vld [vmem:[%s437 + $0x98] sm:$0xff]
        %v691 = vld [vmem:[%s437 + $0xa0] sm:$0xff]
        %v692 = vld [vmem:[%s437 + $0xa8] sm:$0xff]
        %v693 = vld [vmem:[%s437 + $0xb0] sm:$0xff]
        %v694 = vld [vmem:[%s437 + $0xb8] sm:$0xff]
        %v695 = vld [vmem:[%s437 + $0xc0] sm:$0xff]
        %v696 = vld [vmem:[%s437 + $0xc8] sm:$0xff]
        %v697 = vld [vmem:[%s437 + $0xd0] sm:$0xff]
        %v698 = vld [vmem:[%s437 + $0xd8] sm:$0xff]
        %v699 = vld [vmem:[%s437 + $0xe0] sm:$0xff]
        %v700 = vld [vmem:[%s437 + $0xe8] sm:$0xff]
        %v701 = vld [vmem:[%s437 + $0xf0] sm:$0xff]
        %v702 = vld [vmem:[%s437 + $0xf8] sm:$0xff]
        %v703 = vld [vmem:[%s437 + $0x100] sm:$0xff]
        %v704 = vld [vmem:[%s437 + $0x108] sm:$0xff]
        %v705 = vld [vmem:[%s437 + $0x110] sm:$0xff]
        %v706 = vld [vmem:[%s437 + $0x118] sm:$0xff]
        %v707 = vld [vmem:[%s437 + $0x120] sm:$0xff]
        %v708 = vld [vmem:[%s437 + $0x128] sm:$0xff]
        %v709 = vld [vmem:[%s437 + $0x130] sm:$0xff]
        %v710 = vld [vmem:[%s437 + $0x138] sm:$0xff]
        %v711 = vld [vmem:[%s437 + $0x140] sm:$0xff]
        %v712 = vld [vmem:[%s437 + $0x148] sm:$0xff]
        %v713 = vld [vmem:[%s437 + $0x150] sm:$0xff]
        %v714 = vld [vmem:[%s437 + $0x158] sm:$0xff]
        %v715 = vld [vmem:[%s437 + $0x160] sm:$0xff]
        %v716 = vld [vmem:[%s437 + $0x168] sm:$0xff]
        %v717 = vld [vmem:[%s437 + $0x170] sm:$0xff]
        %v718 = vld [vmem:[%s437 + $0x178] sm:$0xff]
        %v719 = vld [vmem:[%s437 + $0x180] sm:$0xff]
        %v720 = vld [vmem:[%s437 + $0x188] sm:$0xff]
        %v721 = vld [vmem:[%s437 + $0x190] sm:$0xff]
        %v722 = vld [vmem:[%s437 + $0x198] sm:$0xff]
        %v723 = vld [vmem:[%s437 + $0x1a0] sm:$0xff]
        %v724 = vld [vmem:[%s437 + $0x1a8] sm:$0xff]
        %v725 = vld [vmem:[%s437 + $0x1b0] sm:$0xff]
        %v726 = vld [vmem:[%s437 + $0x1b8] sm:$0xff]
        %v727 = vld [vmem:[%s437 + $0x1c0] sm:$0xff]
        %v728 = vld [vmem:[%s437 + $0x1c8] sm:$0xff]
        %v729 = vld [vmem:[%s437 + $0x1d0] sm:$0xff]
        %v730 = vld [vmem:[%s437 + $0x1d8] sm:$0xff]
        %v731 = vld [vmem:[%s437 + $0x1e0] sm:$0xff]
        %v732 = vld [vmem:[%s437 + $0x1e8] sm:$0xff]
        %v733 = vld [vmem:[%s437 + $0x1f0] sm:$0xff]
        %v734 = vld [vmem:[%s437 + $0x1f8] sm:$0xff]
        %v735 = vld [vmem:[#allocation12] sm:$0xff]
        %v736 = vld [vmem:[#allocation12 + $0x8] sm:$0xff]
        %v737 = vld [vmem:[#allocation12 + $0x10] sm:$0xff]
        %v738 = vld [vmem:[#allocation12 + $0x18] sm:$0xff]
        %v739 = vld [vmem:[#allocation12 + $0x20] sm:$0xff]
        %v740 = vld [vmem:[#allocation12 + $0x28] sm:$0xff]
        %v741 = vld [vmem:[#allocation12 + $0x30] sm:$0xff]
        %v742 = vld [vmem:[#allocation12 + $0x38] sm:$0xff]
        %v743 = vld [vmem:[#allocation12 + $0x40] sm:$0xff]
        %v744 = vld [vmem:[#allocation12 + $0x48] sm:$0xff]
        %v745 = vld [vmem:[#allocation12 + $0x50] sm:$0xff]
        %v746 = vld [vmem:[#allocation12 + $0x58] sm:$0xff]
        %v747 = vld [vmem:[#allocation12 + $0x60] sm:$0xff]
        %v748 = vld [vmem:[#allocation12 + $0x68] sm:$0xff]
        %v749 = vld [vmem:[#allocation12 + $0x70] sm:$0xff]
        %v750 = vld [vmem:[#allocation12 + $0x78] sm:$0xff]
        %v751 = vld [vmem:[#allocation2] sm:$0xff]
        %v752 = vld [vmem:[#allocation2 + $0x8] sm:$0xff]
        %753 = vxpose.xlu0.b32.start [1/16] %v642, 128
        %754 = vxpose.xlu0.b32.cont [2/16] %v646, 128
        %755 = vxpose.xlu0.b32.cont [3/16] 0.0, 128
        %756 = vxpose.xlu0.b32.cont [4/16] 0.0, 128
        %757 = vxpose.xlu0.b32.cont [5/16] 0.0, 128
        %758 = vxpose.xlu0.b32.cont [6/16] 0.0, 128
        %759 = vxpose.xlu0.b32.cont [7/16] 0.0, 128
        %760 = vxpose.xlu0.b32.cont [8/16] 0.0, 128
        %761 = vxpose.xlu0.b32.cont [9/16] 0.0, 128
        %762 = vxpose.xlu0.b32.cont [10/16] 0.0, 128
        %763 = vxpose.xlu0.b32.cont [11/16] 0.0, 128
        %764 = vxpose.xlu0.b32.cont [12/16] 0.0, 128
        %765 = vxpose.xlu0.b32.cont [13/16] 0.0, 128
        %766 = vxpose.xlu0.b32.cont [14/16] 0.0, 128
        %767 = vxpose.xlu0.b32.cont [15/16] 0.0, 128
        %768 = vxpose.xlu0.b32.end [16/16] 0.0, 128
        %v769 = vpop.trf.xlu0
        %v770 = vpop.trf.xlu0
        %v771 = vpop.trf.xlu0
        %v772 = vpop.trf.xlu0
        %v773 = vpop.trf.xlu0
        %v774 = vpop.trf.xlu0
        %v775 = vpop.trf.xlu0
        %v776 = vpop.trf.xlu0
        %v777 = vpop.trf.xlu0
        %v778 = vpop.trf.xlu0
        %v779 = vpop.trf.xlu0
        %v780 = vpop.trf.xlu0
        %v781 = vpop.trf.xlu0
        %v782 = vpop.trf.xlu0
        %v783 = vpop.trf.xlu0
        %v784 = vpop.trf.xlu0
        %785 = vxpose.xlu0.b32.start [1/16] %v643, 128
        %786 = vxpose.xlu0.b32.cont [2/16] %v647, 128
        %787 = vxpose.xlu0.b32.cont [3/16] 0.0, 128
        %788 = vxpose.xlu0.b32.cont [4/16] 0.0, 128
        %789 = vxpose.xlu0.b32.cont [5/16] 0.0, 128
        %790 = vxpose.xlu0.b32.cont [6/16] 0.0, 128
        %791 = vxpose.xlu0.b32.cont [7/16] 0.0, 128
        %792 = vxpose.xlu0.b32.cont [8/16] 0.0, 128
        %793 = vxpose.xlu0.b32.cont [9/16] 0.0, 128
        %794 = vxpose.xlu0.b32.cont [10/16] 0.0, 128
        %795 = vxpose.xlu0.b32.cont [11/16] 0.0, 128
        %796 = vxpose.xlu0.b32.cont [12/16] 0.0, 128
        %797 = vxpose.xlu0.b32.cont [13/16] 0.0, 128
        %798 = vxpose.xlu0.b32.cont [14/16] 0.0, 128
        %799 = vxpose.xlu0.b32.cont [15/16] 0.0, 128
        %800 = vxpose.xlu0.b32.end [16/16] 0.0, 128
        %v801 = vpop.trf.xlu0
        %v802 = vpop.trf.xlu0
        %v803 = vpop.trf.xlu0
        %v804 = vpop.trf.xlu0
        %v805 = vpop.trf.xlu0
        %v806 = vpop.trf.xlu0
        %v807 = vpop.trf.xlu0
        %v808 = vpop.trf.xlu0
        %v809 = vpop.trf.xlu0
        %v810 = vpop.trf.xlu0
        %v811 = vpop.trf.xlu0
        %v812 = vpop.trf.xlu0
        %v813 = vpop.trf.xlu0
        %v814 = vpop.trf.xlu0
        %v815 = vpop.trf.xlu0
        %v816 = vpop.trf.xlu0
        %817 = vxpose.xlu0.b32.start [1/16] %v644, 128
        %818 = vxpose.xlu0.b32.cont [2/16] %v648, 128
        %819 = vxpose.xlu0.b32.cont [3/16] 0.0, 128
        %820 = vxpose.xlu0.b32.cont [4/16] 0.0, 128
        %821 = vxpose.xlu0.b32.cont [5/16] 0.0, 128
        %822 = vxpose.xlu0.b32.cont [6/16] 0.0, 128
        %823 = vxpose.xlu0.b32.cont [7/16] 0.0, 128
        %824 = vxpose.xlu0.b32.cont [8/16] 0.0, 128
        %825 = vxpose.xlu0.b32.cont [9/16] 0.0, 128
        %826 = vxpose.xlu0.b32.cont [10/16] 0.0, 128
        %827 = vxpose.xlu0.b32.cont [11/16] 0.0, 128
        %828 = vxpose.xlu0.b32.cont [12/16] 0.0, 128
        %829 = vxpose.xlu0.b32.cont [13/16] 0.0, 128
        %830 = vxpose.xlu0.b32.cont [14/16] 0.0, 128
        %831 = vxpose.xlu0.b32.cont [15/16] 0.0, 128
        %832 = vxpose.xlu0.b32.end [16/16] 0.0, 128
        %v833 = vpop.trf.xlu0
        %v834 = vpop.trf.xlu0
        %v835 = vpop.trf.xlu0
        %v836 = vpop.trf.xlu0
        %v837 = vpop.trf.xlu0
        %v838 = vpop.trf.xlu0
        %v839 = vpop.trf.xlu0
        %v840 = vpop.trf.xlu0
        %v841 = vpop.trf.xlu0
        %v842 = vpop.trf.xlu0
        %v843 = vpop.trf.xlu0
        %v844 = vpop.trf.xlu0
        %v845 = vpop.trf.xlu0
        %v846 = vpop.trf.xlu0
        %v847 = vpop.trf.xlu0
        %v848 = vpop.trf.xlu0
        %849 = vxpose.xlu0.b32.start [1/16] %v645, 128
        %850 = vxpose.xlu0.b32.cont [2/16] %v649, 128
        %851 = vxpose.xlu0.b32.cont [3/16] 0.0, 128
        %852 = vxpose.xlu0.b32.cont [4/16] 0.0, 128
        %853 = vxpose.xlu0.b32.cont [5/16] 0.0, 128
        %854 = vxpose.xlu0.b32.cont [6/16] 0.0, 128
        %855 = vxpose.xlu0.b32.cont [7/16] 0.0, 128
        %856 = vxpose.xlu0.b32.cont [8/16] 0.0, 128
        %857 = vxpose.xlu0.b32.cont [9/16] 0.0, 128
        %858 = vxpose.xlu0.b32.cont [10/16] 0.0, 128
        %859 = vxpose.xlu0.b32.cont [11/16] 0.0, 128
        %860 = vxpose.xlu0.b32.cont [12/16] 0.0, 128
        %861 = vxpose.xlu0.b32.cont [13/16] 0.0, 128
        %862 = vxpose.xlu0.b32.cont [14/16] 0.0, 128
        %863 = vxpose.xlu0.b32.cont [15/16] 0.0, 128
        %864 = vxpose.xlu0.b32.end [16/16] 0.0, 128
        %v865 = vpop.trf.xlu0
        %v866 = vpop.trf.xlu0
        %v867 = vpop.trf.xlu0
        %v868 = vpop.trf.xlu0
        %v869 = vpop.trf.xlu0
        %v870 = vpop.trf.xlu0
        %v871 = vpop.trf.xlu0
        %v872 = vpop.trf.xlu0
        %v873 = vpop.trf.xlu0
        %v874 = vpop.trf.xlu0
        %v875 = vpop.trf.xlu0
        %v876 = vpop.trf.xlu0
        %v877 = vpop.trf.xlu0
        %v878 = vpop.trf.xlu0
        %v879 = vpop.trf.xlu0
        %v880 = vpop.trf.xlu0
        %vm881 = vcmask 130048
        %v883 = vsel %vm881, %v769, 0
        %v886 = vsel %vm881, %v770, 0
        %v889 = vsel %vm881, %v771, 0
        %v892 = vsel %vm881, %v772, 0
        %v895 = vsel %vm881, %v773, 0
        %v898 = vsel %vm881, %v774, 0
        %v901 = vsel %vm881, %v775, 0
        %v904 = vsel %vm881, %v776, 0
        %v907 = vsel %vm881, %v777, 0
        %v910 = vsel %vm881, %v778, 0
        %v913 = vsel %vm881, %v779, 0
        %v916 = vsel %vm881, %v780, 0
        %v919 = vsel %vm881, %v781, 0
        %v922 = vsel %vm881, %v782, 0
        %v925 = vsel %vm881, %v783, 0
        %v928 = vsel %vm881, %v784, 0
        %v931 = vsel %vm881, %v801, 0
        %v934 = vsel %vm881, %v802, 0
        %v937 = vsel %vm881, %v803, 0
        %v940 = vsel %vm881, %v804, 0
        %v943 = vsel %vm881, %v805, 0
        %v946 = vsel %vm881, %v806, 0
        %v949 = vsel %vm881, %v807, 0
        %v952 = vsel %vm881, %v808, 0
        %v955 = vsel %vm881, %v809, 0
        %v958 = vsel %vm881, %v810, 0
        %v961 = vsel %vm881, %v811, 0
        %v964 = vsel %vm881, %v812, 0
        %v967 = vsel %vm881, %v813, 0
        %v970 = vsel %vm881, %v814, 0
        %v973 = vsel %vm881, %v815, 0
        %v976 = vsel %vm881, %v816, 0
        %v979 = vsel %vm881, %v833, 0
        %v982 = vsel %vm881, %v834, 0
        %v985 = vsel %vm881, %v835, 0
        %v988 = vsel %vm881, %v836, 0
        %v991 = vsel %vm881, %v837, 0
        %v994 = vsel %vm881, %v838, 0
        %v997 = vsel %vm881, %v839, 0
        %v1000 = vsel %vm881, %v840, 0
        %v1003 = vsel %vm881, %v841, 0
        %v1006 = vsel %vm881, %v842, 0
        %v1009 = vsel %vm881, %v843, 0
        %v1012 = vsel %vm881, %v844, 0
        %v1015 = vsel %vm881, %v845, 0
        %v1018 = vsel %vm881, %v846, 0
        %v1021 = vsel %vm881, %v847, 0
        %v1024 = vsel %vm881, %v848, 0
        %v1027 = vsel %vm881, %v865, 0
        %v1030 = vsel %vm881, %v866, 0
        %v1033 = vsel %vm881, %v867, 0
        %v1036 = vsel %vm881, %v868, 0
        %v1039 = vsel %vm881, %v869, 0
        %v1042 = vsel %vm881, %v870, 0
        %v1045 = vsel %vm881, %v871, 0
        %v1048 = vsel %vm881, %v872, 0
        %v1051 = vsel %vm881, %v873, 0
        %v1054 = vsel %vm881, %v874, 0
        %v1057 = vsel %vm881, %v875, 0
        %v1060 = vsel %vm881, %v876, 0
        %v1063 = vsel %vm881, %v877, 0
        %v1066 = vsel %vm881, %v878, 0
        %v1069 = vsel %vm881, %v879, 0
        %v1072 = vsel %vm881, %v880, 0
        %1074 = vmatpush.msra.mxu0 0.0
        %1075 = vmatpush.msra.mxu0 0.0
        %1076 = vmatpush.msra.mxu0 0.0
        %1077 = vmatpush.msra.mxu0 0.0
        %1078 = vmatpush.msra.mxu0 0.0
        %1079 = vmatpush.msra.mxu0 0.0
        %1080 = vmatpush.msra.mxu0 0.0
        %1081 = vmatpush.msra.mxu0 0.0
        %1082 = vmatpush.msra.mxu0 0.0
        %1083 = vmatpush.msra.mxu0 0.0
        %1084 = vmatpush.msra.mxu0 0.0
        %1085 = vmatpush.msra.mxu0 0.0
        %1086 = vmatpush.msra.mxu0 0.0
        %1087 = vmatpush.msra.mxu0 0.0
        %1088 = vmatpush.msra.mxu0 %v752
        %1089 = vmatpush.msra.mxu0 %v751
        %1090 = vmatmul.f32.gmra.mxu0 %v883
        %v1091 = vpop.f32.mrf.mxu0
        %v1092 = vadd.f32 0.0, %v1091
        %1093 = vmatmul.f32.gmra.mxu0 %v886
        %v1094 = vpop.f32.mrf.mxu0
        %v1095 = vadd.f32 0.0, %v1094
        %1096 = vmatmul.f32.gmra.mxu0 %v889
        %v1097 = vpop.f32.mrf.mxu0
        %v1098 = vadd.f32 0.0, %v1097
        %1099 = vmatmul.f32.gmra.mxu0 %v892
        %v1100 = vpop.f32.mrf.mxu0
        %v1101 = vadd.f32 0.0, %v1100
        %1102 = vmatmul.f32.gmra.mxu0 %v895
        %v1103 = vpop.f32.mrf.mxu0
        %v1104 = vadd.f32 0.0, %v1103
        %1105 = vmatmul.f32.gmra.mxu0 %v898
        %v1106 = vpop.f32.mrf.mxu0
        %v1107 = vadd.f32 0.0, %v1106
        %1108 = vmatmul.f32.gmra.mxu0 %v901
        %v1109 = vpop.f32.mrf.mxu0
        %v1110 = vadd.f32 0.0, %v1109
        %1111 = vmatmul.f32.gmra.mxu0 %v904
        %v1112 = vpop.f32.mrf.mxu0
        %v1113 = vadd.f32 0.0, %v1112
        %1114 = vmatmul.f32.gmra.mxu0 %v907
        %v1115 = vpop.f32.mrf.mxu0
        %v1116 = vadd.f32 0.0, %v1115
        %1117 = vmatmul.f32.gmra.mxu0 %v910
        %v1118 = vpop.f32.mrf.mxu0
        %v1119 = vadd.f32 0.0, %v1118
        %1120 = vmatmul.f32.gmra.mxu0 %v913
        %v1121 = vpop.f32.mrf.mxu0
        %v1122 = vadd.f32 0.0, %v1121
        %1123 = vmatmul.f32.gmra.mxu0 %v916
        %v1124 = vpop.f32.mrf.mxu0
        %v1125 = vadd.f32 0.0, %v1124
        %1126 = vmatmul.f32.gmra.mxu0 %v919
        %v1127 = vpop.f32.mrf.mxu0
        %v1128 = vadd.f32 0.0, %v1127
        %1129 = vmatmul.f32.gmra.mxu0 %v922
        %v1130 = vpop.f32.mrf.mxu0
        %v1131 = vadd.f32 0.0, %v1130
        %1132 = vmatmul.f32.gmra.mxu0 %v925
        %v1133 = vpop.f32.mrf.mxu0
        %v1134 = vadd.f32 0.0, %v1133
        %1135 = vmatmul.f32.gmra.mxu0 %v928
        %v1136 = vpop.f32.mrf.mxu0
        %v1137 = vadd.f32 0.0, %v1136
        %1138 = vmatmul.f32.gmra.mxu0 %v931
        %v1139 = vpop.f32.mrf.mxu0
        %v1140 = vadd.f32 0.0, %v1139
        %1141 = vmatmul.f32.gmra.mxu0 %v934
        %v1142 = vpop.f32.mrf.mxu0
        %v1143 = vadd.f32 0.0, %v1142
        %1144 = vmatmul.f32.gmra.mxu0 %v937
        %v1145 = vpop.f32.mrf.mxu0
        %v1146 = vadd.f32 0.0, %v1145
        %1147 = vmatmul.f32.gmra.mxu0 %v940
        %v1148 = vpop.f32.mrf.mxu0
        %v1149 = vadd.f32 0.0, %v1148
        %1150 = vmatmul.f32.gmra.mxu0 %v943
        %v1151 = vpop.f32.mrf.mxu0
        %v1152 = vadd.f32 0.0, %v1151
        %1153 = vmatmul.f32.gmra.mxu0 %v946
        %v1154 = vpop.f32.mrf.mxu0
        %v1155 = vadd.f32 0.0, %v1154
        %1156 = vmatmul.f32.gmra.mxu0 %v949
        %v1157 = vpop.f32.mrf.mxu0
        %v1158 = vadd.f32 0.0, %v1157
        %1159 = vmatmul.f32.gmra.mxu0 %v952
        %v1160 = vpop.f32.mrf.mxu0
        %v1161 = vadd.f32 0.0, %v1160
        %1162 = vmatmul.f32.gmra.mxu0 %v955
        %v1163 = vpop.f32.mrf.mxu0
        %v1164 = vadd.f32 0.0, %v1163
        %1165 = vmatmul.f32.gmra.mxu0 %v958
        %v1166 = vpop.f32.mrf.mxu0
        %v1167 = vadd.f32 0.0, %v1166
        %1168 = vmatmul.f32.gmra.mxu0 %v961
        %v1169 = vpop.f32.mrf.mxu0
        %v1170 = vadd.f32 0.0, %v1169
        %1171 = vmatmul.f32.gmra.mxu0 %v964
        %v1172 = vpop.f32.mrf.mxu0
        %v1173 = vadd.f32 0.0, %v1172
        %1174 = vmatmul.f32.gmra.mxu0 %v967
        %v1175 = vpop.f32.mrf.mxu0
        %v1176 = vadd.f32 0.0, %v1175
        %1177 = vmatmul.f32.gmra.mxu0 %v970
        %v1178 = vpop.f32.mrf.mxu0
        %v1179 = vadd.f32 0.0, %v1178
        %1180 = vmatmul.f32.gmra.mxu0 %v973
        %v1181 = vpop.f32.mrf.mxu0
        %v1182 = vadd.f32 0.0, %v1181
        %1183 = vmatmul.f32.gmra.mxu0 %v976
        %v1184 = vpop.f32.mrf.mxu0
        %v1185 = vadd.f32 0.0, %v1184
        %1186 = vmatmul.f32.gmra.mxu0 %v979
        %v1187 = vpop.f32.mrf.mxu0
        %v1188 = vadd.f32 0.0, %v1187
        %1189 = vmatmul.f32.gmra.mxu0 %v982
        %v1190 = vpop.f32.mrf.mxu0
        %v1191 = vadd.f32 0.0, %v1190
        %1192 = vmatmul.f32.gmra.mxu0 %v985
        %v1193 = vpop.f32.mrf.mxu0
        %v1194 = vadd.f32 0.0, %v1193
        %1195 = vmatmul.f32.gmra.mxu0 %v988
        %v1196 = vpop.f32.mrf.mxu0
        %v1197 = vadd.f32 0.0, %v1196
        %1198 = vmatmul.f32.gmra.mxu0 %v991
        %v1199 = vpop.f32.mrf.mxu0
        %v1200 = vadd.f32 0.0, %v1199
        %1201 = vmatmul.f32.gmra.mxu0 %v994
        %v1202 = vpop.f32.mrf.mxu0
        %v1203 = vadd.f32 0.0, %v1202
        %1204 = vmatmul.f32.gmra.mxu0 %v997
        %v1205 = vpop.f32.mrf.mxu0
        %v1206 = vadd.f32 0.0, %v1205
        %1207 = vmatmul.f32.gmra.mxu0 %v1000
        %v1208 = vpop.f32.mrf.mxu0
        %v1209 = vadd.f32 0.0, %v1208
        %1210 = vmatmul.f32.gmra.mxu0 %v1003
        %v1211 = vpop.f32.mrf.mxu0
        %v1212 = vadd.f32 0.0, %v1211
        %1213 = vmatmul.f32.gmra.mxu0 %v1006
        %v1214 = vpop.f32.mrf.mxu0
        %v1215 = vadd.f32 0.0, %v1214
        %1216 = vmatmul.f32.gmra.mxu0 %v1009
        %v1217 = vpop.f32.mrf.mxu0
        %v1218 = vadd.f32 0.0, %v1217
        %1219 = vmatmul.f32.gmra.mxu0 %v1012
        %v1220 = vpop.f32.mrf.mxu0
        %v1221 = vadd.f32 0.0, %v1220
        %1222 = vmatmul.f32.gmra.mxu0 %v1015
        %v1223 = vpop.f32.mrf.mxu0
        %v1224 = vadd.f32 0.0, %v1223
        %1225 = vmatmul.f32.gmra.mxu0 %v1018
        %v1226 = vpop.f32.mrf.mxu0
        %v1227 = vadd.f32 0.0, %v1226
        %1228 = vmatmul.f32.gmra.mxu0 %v1021
        %v1229 = vpop.f32.mrf.mxu0
        %v1230 = vadd.f32 0.0, %v1229
        %1231 = vmatmul.f32.gmra.mxu0 %v1024
        %v1232 = vpop.f32.mrf.mxu0
        %v1233 = vadd.f32 0.0, %v1232
        %1234 = vmatmul.f32.gmra.mxu0 %v1027
        %v1235 = vpop.f32.mrf.mxu0
        %v1236 = vadd.f32 0.0, %v1235
        %1237 = vmatmul.f32.gmra.mxu0 %v1030
        %v1238 = vpop.f32.mrf.mxu0
        %v1239 = vadd.f32 0.0, %v1238
        %1240 = vmatmul.f32.gmra.mxu0 %v1033
        %v1241 = vpop.f32.mrf.mxu0
        %v1242 = vadd.f32 0.0, %v1241
        %1243 = vmatmul.f32.gmra.mxu0 %v1036
        %v1244 = vpop.f32.mrf.mxu0
        %v1245 = vadd.f32 0.0, %v1244
        %1246 = vmatmul.f32.gmra.mxu0 %v1039
        %v1247 = vpop.f32.mrf.mxu0
        %v1248 = vadd.f32 0.0, %v1247
        %1249 = vmatmul.f32.gmra.mxu0 %v1042
        %v1250 = vpop.f32.mrf.mxu0
        %v1251 = vadd.f32 0.0, %v1250
        %1252 = vmatmul.f32.gmra.mxu0 %v1045
        %v1253 = vpop.f32.mrf.mxu0
        %v1254 = vadd.f32 0.0, %v1253
        %1255 = vmatmul.f32.gmra.mxu0 %v1048
        %v1256 = vpop.f32.mrf.mxu0
        %v1257 = vadd.f32 0.0, %v1256
        %1258 = vmatmul.f32.gmra.mxu0 %v1051
        %v1259 = vpop.f32.mrf.mxu0
        %v1260 = vadd.f32 0.0, %v1259
        %1261 = vmatmul.f32.gmra.mxu0 %v1054
        %v1262 = vpop.f32.mrf.mxu0
        %v1263 = vadd.f32 0.0, %v1262
        %1264 = vmatmul.f32.gmra.mxu0 %v1057
        %v1265 = vpop.f32.mrf.mxu0
        %v1266 = vadd.f32 0.0, %v1265
        %1267 = vmatmul.f32.gmra.mxu0 %v1060
        %v1268 = vpop.f32.mrf.mxu0
        %v1269 = vadd.f32 0.0, %v1268
        %1270 = vmatmul.f32.gmra.mxu0 %v1063
        %v1271 = vpop.f32.mrf.mxu0
        %v1272 = vadd.f32 0.0, %v1271
        %1273 = vmatmul.f32.gmra.mxu0 %v1066
        %v1274 = vpop.f32.mrf.mxu0
        %v1275 = vadd.f32 0.0, %v1274
        %1276 = vmatmul.f32.gmra.mxu0 %v1069
        %v1277 = vpop.f32.mrf.mxu0
        %v1278 = vadd.f32 0.0, %v1277
        %1279 = vmatmul.f32.gmra.mxu0 %v1072
        %v1280 = vpop.f32.mrf.mxu0
        %v1281 = vadd.f32 0.0, %v1280
        %1282 = vdwg.mxu0
        %1283 = vmatpush.msra.mxu0 %v750
        %1284 = vmatpush.msra.mxu0 %v749
        %1285 = vmatpush.msra.mxu0 %v748
        %1286 = vmatpush.msra.mxu0 %v747
        %1287 = vmatpush.msra.mxu0 %v746
        %1288 = vmatpush.msra.mxu0 %v745
        %1289 = vmatpush.msra.mxu0 %v744
        %1290 = vmatpush.msra.mxu0 %v743
        %1291 = vmatpush.msra.mxu0 %v742
        %1292 = vmatpush.msra.mxu0 %v741
        %1293 = vmatpush.msra.mxu0 %v740
        %1294 = vmatpush.msra.mxu0 %v739
        %1295 = vmatpush.msra.mxu0 %v738
        %1296 = vmatpush.msra.mxu0 %v737
        %1297 = vmatpush.msra.mxu0 %v736
        %1298 = vmatpush.msra.mxu0 %v735
        %1299 = vmatmul.f32.gmra.mxu0 %v671
        %v1300 = vpop.f32.mrf.mxu0
        %v1301 = vadd.f32 %v1092, %v1300
        %1302 = vmatmul.f32.gmra.mxu0 %v672
        %v1303 = vpop.f32.mrf.mxu0
        %v1304 = vadd.f32 %v1095, %v1303
        %1305 = vmatmul.f32.gmra.mxu0 %v673
        %v1306 = vpop.f32.mrf.mxu0
        %v1307 = vadd.f32 %v1098, %v1306
        %1308 = vmatmul.f32.gmra.mxu0 %v674
        %v1309 = vpop.f32.mrf.mxu0
        %v1310 = vadd.f32 %v1101, %v1309
        %1311 = vmatmul.f32.gmra.mxu0 %v675
        %v1312 = vpop.f32.mrf.mxu0
        %v1313 = vadd.f32 %v1104, %v1312
        %1314 = vmatmul.f32.gmra.mxu0 %v676
        %v1315 = vpop.f32.mrf.mxu0
        %v1316 = vadd.f32 %v1107, %v1315
        %1317 = vmatmul.f32.gmra.mxu0 %v677
        %v1318 = vpop.f32.mrf.mxu0
        %v1319 = vadd.f32 %v1110, %v1318
        %1320 = vmatmul.f32.gmra.mxu0 %v678
        %v1321 = vpop.f32.mrf.mxu0
        %v1322 = vadd.f32 %v1113, %v1321
        %1323 = vmatmul.f32.gmra.mxu0 %v679
        %v1324 = vpop.f32.mrf.mxu0
        %v1325 = vadd.f32 %v1116, %v1324
        %1326 = vmatmul.f32.gmra.mxu0 %v680
        %v1327 = vpop.f32.mrf.mxu0
        %v1328 = vadd.f32 %v1119, %v1327
        %1329 = vmatmul.f32.gmra.mxu0 %v681
        %v1330 = vpop.f32.mrf.mxu0
        %v1331 = vadd.f32 %v1122, %v1330
        %1332 = vmatmul.f32.gmra.mxu0 %v682
        %v1333 = vpop.f32.mrf.mxu0
        %v1334 = vadd.f32 %v1125, %v1333
        %1335 = vmatmul.f32.gmra.mxu0 %v683
        %v1336 = vpop.f32.mrf.mxu0
        %v1337 = vadd.f32 %v1128, %v1336
        %1338 = vmatmul.f32.gmra.mxu0 %v684
        %v1339 = vpop.f32.mrf.mxu0
        %v1340 = vadd.f32 %v1131, %v1339
        %1341 = vmatmul.f32.gmra.mxu0 %v685
        %v1342 = vpop.f32.mrf.mxu0
        %v1343 = vadd.f32 %v1134, %v1342
        %1344 = vmatmul.f32.gmra.mxu0 %v686
        %v1345 = vpop.f32.mrf.mxu0
        %v1346 = vadd.f32 %v1137, %v1345
        %1347 = vmatmul.f32.gmra.mxu0 %v687
        %v1348 = vpop.f32.mrf.mxu0
        %v1349 = vadd.f32 %v1140, %v1348
        %1350 = vmatmul.f32.gmra.mxu0 %v688
        %v1351 = vpop.f32.mrf.mxu0
        %v1352 = vadd.f32 %v1143, %v1351
        %1353 = vmatmul.f32.gmra.mxu0 %v689
        %v1354 = vpop.f32.mrf.mxu0
        %v1355 = vadd.f32 %v1146, %v1354
        %1356 = vmatmul.f32.gmra.mxu0 %v690
        %v1357 = vpop.f32.mrf.mxu0
        %v1358 = vadd.f32 %v1149, %v1357
        %1359 = vmatmul.f32.gmra.mxu0 %v691
        %v1360 = vpop.f32.mrf.mxu0
        %v1361 = vadd.f32 %v1152, %v1360
        %1362 = vmatmul.f32.gmra.mxu0 %v692
        %v1363 = vpop.f32.mrf.mxu0
        %v1364 = vadd.f32 %v1155, %v1363
        %1365 = vmatmul.f32.gmra.mxu0 %v693
        %v1366 = vpop.f32.mrf.mxu0
        %v1367 = vadd.f32 %v1158, %v1366
        %1368 = vmatmul.f32.gmra.mxu0 %v694
        %v1369 = vpop.f32.mrf.mxu0
        %v1370 = vadd.f32 %v1161, %v1369
        %1371 = vmatmul.f32.gmra.mxu0 %v695
        %v1372 = vpop.f32.mrf.mxu0
        %v1373 = vadd.f32 %v1164, %v1372
        %1374 = vmatmul.f32.gmra.mxu0 %v696
        %v1375 = vpop.f32.mrf.mxu0
        %v1376 = vadd.f32 %v1167, %v1375
        %1377 = vmatmul.f32.gmra.mxu0 %v697
        %v1378 = vpop.f32.mrf.mxu0
        %v1379 = vadd.f32 %v1170, %v1378
        %1380 = vmatmul.f32.gmra.mxu0 %v698
        %v1381 = vpop.f32.mrf.mxu0
        %v1382 = vadd.f32 %v1173, %v1381
        %1383 = vmatmul.f32.gmra.mxu0 %v699
        %v1384 = vpop.f32.mrf.mxu0
        %v1385 = vadd.f32 %v1176, %v1384
        %1386 = vmatmul.f32.gmra.mxu0 %v700
        %v1387 = vpop.f32.mrf.mxu0
        %v1388 = vadd.f32 %v1179, %v1387
        %1389 = vmatmul.f32.gmra.mxu0 %v701
        %v1390 = vpop.f32.mrf.mxu0
        %v1391 = vadd.f32 %v1182, %v1390
        %1392 = vmatmul.f32.gmra.mxu0 %v702
        %v1393 = vpop.f32.mrf.mxu0
        %v1394 = vadd.f32 %v1185, %v1393
        %1395 = vmatmul.f32.gmra.mxu0 %v703
        %v1396 = vpop.f32.mrf.mxu0
        %v1397 = vadd.f32 %v1188, %v1396
        %1398 = vmatmul.f32.gmra.mxu0 %v704
        %v1399 = vpop.f32.mrf.mxu0
        %v1400 = vadd.f32 %v1191, %v1399
        %1401 = vmatmul.f32.gmra.mxu0 %v705
        %v1402 = vpop.f32.mrf.mxu0
        %v1403 = vadd.f32 %v1194, %v1402
        %1404 = vmatmul.f32.gmra.mxu0 %v706
        %v1405 = vpop.f32.mrf.mxu0
        %v1406 = vadd.f32 %v1197, %v1405
        %1407 = vmatmul.f32.gmra.mxu0 %v707
        %v1408 = vpop.f32.mrf.mxu0
        %v1409 = vadd.f32 %v1200, %v1408
        %1410 = vmatmul.f32.gmra.mxu0 %v708
        %v1411 = vpop.f32.mrf.mxu0
        %v1412 = vadd.f32 %v1203, %v1411
        %1413 = vmatmul.f32.gmra.mxu0 %v709
        %v1414 = vpop.f32.mrf.mxu0
        %v1415 = vadd.f32 %v1206, %v1414
        %1416 = vmatmul.f32.gmra.mxu0 %v710
        %v1417 = vpop.f32.mrf.mxu0
        %v1418 = vadd.f32 %v1209, %v1417
        %1419 = vmatmul.f32.gmra.mxu0 %v711
        %v1420 = vpop.f32.mrf.mxu0
        %v1421 = vadd.f32 %v1212, %v1420
        %1422 = vmatmul.f32.gmra.mxu0 %v712
        %v1423 = vpop.f32.mrf.mxu0
        %v1424 = vadd.f32 %v1215, %v1423
        %1425 = vmatmul.f32.gmra.mxu0 %v713
        %v1426 = vpop.f32.mrf.mxu0
        %v1427 = vadd.f32 %v1218, %v1426
        %1428 = vmatmul.f32.gmra.mxu0 %v714
        %v1429 = vpop.f32.mrf.mxu0
        %v1430 = vadd.f32 %v1221, %v1429
        %1431 = vmatmul.f32.gmra.mxu0 %v715
        %v1432 = vpop.f32.mrf.mxu0
        %v1433 = vadd.f32 %v1224, %v1432
        %1434 = vmatmul.f32.gmra.mxu0 %v716
        %v1435 = vpop.f32.mrf.mxu0
        %v1436 = vadd.f32 %v1227, %v1435
        %1437 = vmatmul.f32.gmra.mxu0 %v717
        %v1438 = vpop.f32.mrf.mxu0
        %v1439 = vadd.f32 %v1230, %v1438
        %1440 = vmatmul.f32.gmra.mxu0 %v718
        %v1441 = vpop.f32.mrf.mxu0
        %v1442 = vadd.f32 %v1233, %v1441
        %1443 = vmatmul.f32.gmra.mxu0 %v719
        %v1444 = vpop.f32.mrf.mxu0
        %v1445 = vadd.f32 %v1236, %v1444
        %1446 = vmatmul.f32.gmra.mxu0 %v720
        %v1447 = vpop.f32.mrf.mxu0
        %v1448 = vadd.f32 %v1239, %v1447
        %1449 = vmatmul.f32.gmra.mxu0 %v721
        %v1450 = vpop.f32.mrf.mxu0
        %v1451 = vadd.f32 %v1242, %v1450
        %1452 = vmatmul.f32.gmra.mxu0 %v722
        %v1453 = vpop.f32.mrf.mxu0
        %v1454 = vadd.f32 %v1245, %v1453
        %1455 = vmatmul.f32.gmra.mxu0 %v723
        %v1456 = vpop.f32.mrf.mxu0
        %v1457 = vadd.f32 %v1248, %v1456
        %1458 = vmatmul.f32.gmra.mxu0 %v724
        %v1459 = vpop.f32.mrf.mxu0
        %v1460 = vadd.f32 %v1251, %v1459
        %1461 = vmatmul.f32.gmra.mxu0 %v725
        %v1462 = vpop.f32.mrf.mxu0
        %v1463 = vadd.f32 %v1254, %v1462
        %1464 = vmatmul.f32.gmra.mxu0 %v726
        %v1465 = vpop.f32.mrf.mxu0
        %v1466 = vadd.f32 %v1257, %v1465
        %1467 = vmatmul.f32.gmra.mxu0 %v727
        %v1468 = vpop.f32.mrf.mxu0
        %v1469 = vadd.f32 %v1260, %v1468
        %1470 = vmatmul.f32.gmra.mxu0 %v728
        %v1471 = vpop.f32.mrf.mxu0
        %v1472 = vadd.f32 %v1263, %v1471
        %1473 = vmatmul.f32.gmra.mxu0 %v729
        %v1474 = vpop.f32.mrf.mxu0
        %v1475 = vadd.f32 %v1266, %v1474
        %1476 = vmatmul.f32.gmra.mxu0 %v730
        %v1477 = vpop.f32.mrf.mxu0
        %v1478 = vadd.f32 %v1269, %v1477
        %1479 = vmatmul.f32.gmra.mxu0 %v731
        %v1480 = vpop.f32.mrf.mxu0
        %v1481 = vadd.f32 %v1272, %v1480
        %1482 = vmatmul.f32.gmra.mxu0 %v732
        %v1483 = vpop.f32.mrf.mxu0
        %v1484 = vadd.f32 %v1275, %v1483
        %1485 = vmatmul.f32.gmra.mxu0 %v733
        %v1486 = vpop.f32.mrf.mxu0
        %v1487 = vadd.f32 %v1278, %v1486
        %1488 = vmatmul.f32.gmra.mxu0 %v734
        %v1489 = vpop.f32.mrf.mxu0
        %v1490 = vadd.f32 %v1281, %v1489
        %1491 = vdwg.mxu0
        %v1492 = vld [vmem:[#allocation3] sm:$0xff]
        %v1493 = vld [vmem:[#allocation3 + $0x8] sm:$0xff]
        %1494 = vxpose.xlu0.b32.start [1/16] %v663, 128
        %1495 = vxpose.xlu0.b32.cont [2/16] %v667, 128
        %1496 = vxpose.xlu0.b32.cont [3/16] 0.0, 128
        %1497 = vxpose.xlu0.b32.cont [4/16] 0.0, 128
        %1498 = vxpose.xlu0.b32.cont [5/16] 0.0, 128
        %1499 = vxpose.xlu0.b32.cont [6/16] 0.0, 128
        %1500 = vxpose.xlu0.b32.cont [7/16] 0.0, 128
        %1501 = vxpose.xlu0.b32.cont [8/16] 0.0, 128
        %1502 = vxpose.xlu0.b32.cont [9/16] 0.0, 128
        %1503 = vxpose.xlu0.b32.cont [10/16] 0.0, 128
        %1504 = vxpose.xlu0.b32.cont [11/16] 0.0, 128
        %1505 = vxpose.xlu0.b32.cont [12/16] 0.0, 128
        %1506 = vxpose.xlu0.b32.cont [13/16] 0.0, 128
        %1507 = vxpose.xlu0.b32.cont [14/16] 0.0, 128
        %1508 = vxpose.xlu0.b32.cont [15/16] 0.0, 128
        %1509 = vxpose.xlu0.b32.end [16/16] 0.0, 128
        %v1510 = vpop.trf.xlu0
        %v1511 = vpop.trf.xlu0
        %v1512 = vpop.trf.xlu0
        %v1513 = vpop.trf.xlu0
        %v1514 = vpop.trf.xlu0
        %v1515 = vpop.trf.xlu0
        %v1516 = vpop.trf.xlu0
        %v1517 = vpop.trf.xlu0
        %v1518 = vpop.trf.xlu0
        %v1519 = vpop.trf.xlu0
        %v1520 = vpop.trf.xlu0
        %v1521 = vpop.trf.xlu0
        %v1522 = vpop.trf.xlu0
        %v1523 = vpop.trf.xlu0
        %v1524 = vpop.trf.xlu0
        %v1525 = vpop.trf.xlu0
        %1526 = vxpose.xlu0.b32.start [1/16] %v664, 128
        %1527 = vxpose.xlu0.b32.cont [2/16] %v668, 128
        %1528 = vxpose.xlu0.b32.cont [3/16] 0.0, 128
        %1529 = vxpose.xlu0.b32.cont [4/16] 0.0, 128
        %1530 = vxpose.xlu0.b32.cont [5/16] 0.0, 128
        %1531 = vxpose.xlu0.b32.cont [6/16] 0.0, 128
        %1532 = vxpose.xlu0.b32.cont [7/16] 0.0, 128
        %1533 = vxpose.xlu0.b32.cont [8/16] 0.0, 128
        %1534 = vxpose.xlu0.b32.cont [9/16] 0.0, 128
        %1535 = vxpose.xlu0.b32.cont [10/16] 0.0, 128
        %1536 = vxpose.xlu0.b32.cont [11/16] 0.0, 128
        %1537 = vxpose.xlu0.b32.cont [12/16] 0.0, 128
        %1538 = vxpose.xlu0.b32.cont [13/16] 0.0, 128
        %1539 = vxpose.xlu0.b32.cont [14/16] 0.0, 128
        %1540 = vxpose.xlu0.b32.cont [15/16] 0.0, 128
        %1541 = vxpose.xlu0.b32.end [16/16] 0.0, 128
        %v1542 = vpop.trf.xlu0
        %v1543 = vpop.trf.xlu0
        %v1544 = vpop.trf.xlu0
        %v1545 = vpop.trf.xlu0
        %v1546 = vpop.trf.xlu0
        %v1547 = vpop.trf.xlu0
        %v1548 = vpop.trf.xlu0
        %v1549 = vpop.trf.xlu0
        %v1550 = vpop.trf.xlu0
        %v1551 = vpop.trf.xlu0
        %v1552 = vpop.trf.xlu0
        %v1553 = vpop.trf.xlu0
        %v1554 = vpop.trf.xlu0
        %v1555 = vpop.trf.xlu0
        %v1556 = vpop.trf.xlu0
        %v1557 = vpop.trf.xlu0
        %1558 = vxpose.xlu0.b32.start [1/16] %v665, 128
        %1559 = vxpose.xlu0.b32.cont [2/16] %v669, 128
        %1560 = vxpose.xlu0.b32.cont [3/16] 0.0, 128
        %1561 = vxpose.xlu0.b32.cont [4/16] 0.0, 128
        %1562 = vxpose.xlu0.b32.cont [5/16] 0.0, 128
        %1563 = vxpose.xlu0.b32.cont [6/16] 0.0, 128
        %1564 = vxpose.xlu0.b32.cont [7/16] 0.0, 128
        %1565 = vxpose.xlu0.b32.cont [8/16] 0.0, 128
        %1566 = vxpose.xlu0.b32.cont [9/16] 0.0, 128
        %1567 = vxpose.xlu0.b32.cont [10/16] 0.0, 128
        %1568 = vxpose.xlu0.b32.cont [11/16] 0.0, 128
        %1569 = vxpose.xlu0.b32.cont [12/16] 0.0, 128
        %1570 = vxpose.xlu0.b32.cont [13/16] 0.0, 128
        %1571 = vxpose.xlu0.b32.cont [14/16] 0.0, 128
        %1572 = vxpose.xlu0.b32.cont [15/16] 0.0, 128
        %1573 = vxpose.xlu0.b32.end [16/16] 0.0, 128
        %v1574 = vpop.trf.xlu0
        %v1575 = vpop.trf.xlu0
        %v1576 = vpop.trf.xlu0
        %v1577 = vpop.trf.xlu0
        %v1578 = vpop.trf.xlu0
        %v1579 = vpop.trf.xlu0
        %v1580 = vpop.trf.xlu0
        %v1581 = vpop.trf.xlu0
        %v1582 = vpop.trf.xlu0
        %v1583 = vpop.trf.xlu0
        %v1584 = vpop.trf.xlu0
        %v1585 = vpop.trf.xlu0
        %v1586 = vpop.trf.xlu0
        %v1587 = vpop.trf.xlu0
        %v1588 = vpop.trf.xlu0
        %v1589 = vpop.trf.xlu0
        %1590 = vxpose.xlu0.b32.start [1/16] %v666, 128
        %1591 = vxpose.xlu0.b32.cont [2/16] %v670, 128
        %1592 = vxpose.xlu0.b32.cont [3/16] 0.0, 128
        %1593 = vxpose.xlu0.b32.cont [4/16] 0.0, 128
        %1594 = vxpose.xlu0.b32.cont [5/16] 0.0, 128
        %1595 = vxpose.xlu0.b32.cont [6/16] 0.0, 128
        %1596 = vxpose.xlu0.b32.cont [7/16] 0.0, 128
        %1597 = vxpose.xlu0.b32.cont [8/16] 0.0, 128
        %1598 = vxpose.xlu0.b32.cont [9/16] 0.0, 128
        %1599 = vxpose.xlu0.b32.cont [10/16] 0.0, 128
        %1600 = vxpose.xlu0.b32.cont [11/16] 0.0, 128
        %1601 = vxpose.xlu0.b32.cont [12/16] 0.0, 128
        %1602 = vxpose.xlu0.b32.cont [13/16] 0.0, 128
        %1603 = vxpose.xlu0.b32.cont [14/16] 0.0, 128
        %1604 = vxpose.xlu0.b32.cont [15/16] 0.0, 128
        %1605 = vxpose.xlu0.b32.end [16/16] 0.0, 128
        %v1606 = vpop.trf.xlu0
        %v1607 = vpop.trf.xlu0
        %v1608 = vpop.trf.xlu0
        %v1609 = vpop.trf.xlu0
        %v1610 = vpop.trf.xlu0
        %v1611 = vpop.trf.xlu0
        %v1612 = vpop.trf.xlu0
        %v1613 = vpop.trf.xlu0
        %v1614 = vpop.trf.xlu0
        %v1615 = vpop.trf.xlu0
        %v1616 = vpop.trf.xlu0
        %v1617 = vpop.trf.xlu0
        %v1618 = vpop.trf.xlu0
        %v1619 = vpop.trf.xlu0
        %v1620 = vpop.trf.xlu0
        %v1621 = vpop.trf.xlu0
        %v1623 = vsel %vm881, %v1510, 0
        %v1626 = vsel %vm881, %v1511, 0
        %v1629 = vsel %vm881, %v1512, 0
        %v1632 = vsel %vm881, %v1513, 0
        %v1635 = vsel %vm881, %v1514, 0
        %v1638 = vsel %vm881, %v1515, 0
        %v1641 = vsel %vm881, %v1516, 0
        %v1644 = vsel %vm881, %v1517, 0
        %v1647 = vsel %vm881, %v1518, 0
        %v1650 = vsel %vm881, %v1519, 0
        %v1653 = vsel %vm881, %v1520, 0
        %v1656 = vsel %vm881, %v1521, 0
        %v1659 = vsel %vm881, %v1522, 0
        %v1662 = vsel %vm881, %v1523, 0
        %v1665 = vsel %vm881, %v1524, 0
        %v1668 = vsel %vm881, %v1525, 0
        %v1671 = vsel %vm881, %v1542, 0
        %v1674 = vsel %vm881, %v1543, 0
        %v1677 = vsel %vm881, %v1544, 0
        %v1680 = vsel %vm881, %v1545, 0
        %v1683 = vsel %vm881, %v1546, 0
        %v1686 = vsel %vm881, %v1547, 0
        %v1689 = vsel %vm881, %v1548, 0
        %v1692 = vsel %vm881, %v1549, 0
        %v1695 = vsel %vm881, %v1550, 0
        %v1698 = vsel %vm881, %v1551, 0
        %v1701 = vsel %vm881, %v1552, 0
        %v1704 = vsel %vm881, %v1553, 0
        %v1707 = vsel %vm881, %v1554, 0
        %v1710 = vsel %vm881, %v1555, 0
        %v1713 = vsel %vm881, %v1556, 0
        %v1716 = vsel %vm881, %v1557, 0
        %v1719 = vsel %vm881, %v1574, 0
        %v1722 = vsel %vm881, %v1575, 0
        %v1725 = vsel %vm881, %v1576, 0
        %v1728 = vsel %vm881, %v1577, 0
        %v1731 = vsel %vm881, %v1578, 0
        %v1734 = vsel %vm881, %v1579, 0
        %v1737 = vsel %vm881, %v1580, 0
        %v1740 = vsel %vm881, %v1581, 0
        %v1743 = vsel %vm881, %v1582, 0
        %v1746 = vsel %vm881, %v1583, 0
        %v1749 = vsel %vm881, %v1584, 0
        %v1752 = vsel %vm881, %v1585, 0
        %v1755 = vsel %vm881, %v1586, 0
        %v1758 = vsel %vm881, %v1587, 0
        %v1761 = vsel %vm881, %v1588, 0
        %v1764 = vsel %vm881, %v1589, 0
        %v1767 = vsel %vm881, %v1606, 0
        %v1770 = vsel %vm881, %v1607, 0
        %v1773 = vsel %vm881, %v1608, 0
        %v1776 = vsel %vm881, %v1609, 0
        %v1779 = vsel %vm881, %v1610, 0
        %v1782 = vsel %vm881, %v1611, 0
        %v1785 = vsel %vm881, %v1612, 0
        %v1788 = vsel %vm881, %v1613, 0
        %v1791 = vsel %vm881, %v1614, 0
        %v1794 = vsel %vm881, %v1615, 0
        %v1797 = vsel %vm881, %v1616, 0
        %v1800 = vsel %vm881, %v1617, 0
        %v1803 = vsel %vm881, %v1618, 0
        %v1806 = vsel %vm881, %v1619, 0
        %v1809 = vsel %vm881, %v1620, 0
        %v1812 = vsel %vm881, %v1621, 0
        %1814 = vmatpush.msra.mxu0 0.0
        %1815 = vmatpush.msra.mxu0 0.0
        %1816 = vmatpush.msra.mxu0 0.0
        %1817 = vmatpush.msra.mxu0 0.0
        %1818 = vmatpush.msra.mxu0 0.0
        %1819 = vmatpush.msra.mxu0 0.0
        %1820 = vmatpush.msra.mxu0 0.0
        %1821 = vmatpush.msra.mxu0 0.0
        %1822 = vmatpush.msra.mxu0 0.0
        %1823 = vmatpush.msra.mxu0 0.0
        %1824 = vmatpush.msra.mxu0 0.0
        %1825 = vmatpush.msra.mxu0 0.0
        %1826 = vmatpush.msra.mxu0 0.0
        %1827 = vmatpush.msra.mxu0 0.0
        %1828 = vmatpush.msra.mxu0 %v1493
        %1829 = vmatpush.msra.mxu0 %v1492
        %1830 = vmatmul.f32.gmra.mxu0 %v1623
        %v1831 = vpop.f32.mrf.mxu0
        %v1832 = vadd.f32 0.0, %v1831
        %1833 = vmatmul.f32.gmra.mxu0 %v1626
        %v1834 = vpop.f32.mrf.mxu0
        %v1835 = vadd.f32 0.0, %v1834
        %1836 = vmatmul.f32.gmra.mxu0 %v1629
        %v1837 = vpop.f32.mrf.mxu0
        %v1838 = vadd.f32 0.0, %v1837
        %1839 = vmatmul.f32.gmra.mxu0 %v1632
        %v1840 = vpop.f32.mrf.mxu0
        %v1841 = vadd.f32 0.0, %v1840
        %1842 = vmatmul.f32.gmra.mxu0 %v1635
        %v1843 = vpop.f32.mrf.mxu0
        %v1844 = vadd.f32 0.0, %v1843
        %1845 = vmatmul.f32.gmra.mxu0 %v1638
        %v1846 = vpop.f32.mrf.mxu0
        %v1847 = vadd.f32 0.0, %v1846
        %1848 = vmatmul.f32.gmra.mxu0 %v1641
        %v1849 = vpop.f32.mrf.mxu0
        %v1850 = vadd.f32 0.0, %v1849
        %1851 = vmatmul.f32.gmra.mxu0 %v1644
        %v1852 = vpop.f32.mrf.mxu0
        %v1853 = vadd.f32 0.0, %v1852
        %1854 = vmatmul.f32.gmra.mxu0 %v1647
        %v1855 = vpop.f32.mrf.mxu0
        %v1856 = vadd.f32 0.0, %v1855
        %1857 = vmatmul.f32.gmra.mxu0 %v1650
        %v1858 = vpop.f32.mrf.mxu0
        %v1859 = vadd.f32 0.0, %v1858
        %1860 = vmatmul.f32.gmra.mxu0 %v1653
        %v1861 = vpop.f32.mrf.mxu0
        %v1862 = vadd.f32 0.0, %v1861
        %1863 = vmatmul.f32.gmra.mxu0 %v1656
        %v1864 = vpop.f32.mrf.mxu0
        %v1865 = vadd.f32 0.0, %v1864
        %1866 = vmatmul.f32.gmra.mxu0 %v1659
        %v1867 = vpop.f32.mrf.mxu0
        %v1868 = vadd.f32 0.0, %v1867
        %1869 = vmatmul.f32.gmra.mxu0 %v1662
        %v1870 = vpop.f32.mrf.mxu0
        %v1871 = vadd.f32 0.0, %v1870
        %1872 = vmatmul.f32.gmra.mxu0 %v1665
        %v1873 = vpop.f32.mrf.mxu0
        %v1874 = vadd.f32 0.0, %v1873
        %1875 = vmatmul.f32.gmra.mxu0 %v1668
        %v1876 = vpop.f32.mrf.mxu0
        %v1877 = vadd.f32 0.0, %v1876
        %1878 = vmatmul.f32.gmra.mxu0 %v1671
        %v1879 = vpop.f32.mrf.mxu0
        %v1880 = vadd.f32 0.0, %v1879
        %1881 = vmatmul.f32.gmra.mxu0 %v1674
        %v1882 = vpop.f32.mrf.mxu0
        %v1883 = vadd.f32 0.0, %v1882
        %1884 = vmatmul.f32.gmra.mxu0 %v1677
        %v1885 = vpop.f32.mrf.mxu0
        %v1886 = vadd.f32 0.0, %v1885
        %1887 = vmatmul.f32.gmra.mxu0 %v1680
        %v1888 = vpop.f32.mrf.mxu0
        %v1889 = vadd.f32 0.0, %v1888
        %1890 = vmatmul.f32.gmra.mxu0 %v1683
        %v1891 = vpop.f32.mrf.mxu0
        %v1892 = vadd.f32 0.0, %v1891
        %1893 = vmatmul.f32.gmra.mxu0 %v1686
        %v1894 = vpop.f32.mrf.mxu0
        %v1895 = vadd.f32 0.0, %v1894
        %1896 = vmatmul.f32.gmra.mxu0 %v1689
        %v1897 = vpop.f32.mrf.mxu0
        %v1898 = vadd.f32 0.0, %v1897
        %1899 = vmatmul.f32.gmra.mxu0 %v1692
        %v1900 = vpop.f32.mrf.mxu0
        %v1901 = vadd.f32 0.0, %v1900
        %1902 = vmatmul.f32.gmra.mxu0 %v1695
        %v1903 = vpop.f32.mrf.mxu0
        %v1904 = vadd.f32 0.0, %v1903
        %1905 = vmatmul.f32.gmra.mxu0 %v1698
        %v1906 = vpop.f32.mrf.mxu0
        %v1907 = vadd.f32 0.0, %v1906
        %1908 = vmatmul.f32.gmra.mxu0 %v1701
        %v1909 = vpop.f32.mrf.mxu0
        %v1910 = vadd.f32 0.0, %v1909
        %1911 = vmatmul.f32.gmra.mxu0 %v1704
        %v1912 = vpop.f32.mrf.mxu0
        %v1913 = vadd.f32 0.0, %v1912
        %1914 = vmatmul.f32.gmra.mxu0 %v1707
        %v1915 = vpop.f32.mrf.mxu0
        %v1916 = vadd.f32 0.0, %v1915
        %1917 = vmatmul.f32.gmra.mxu0 %v1710
        %v1918 = vpop.f32.mrf.mxu0
        %v1919 = vadd.f32 0.0, %v1918
        %1920 = vmatmul.f32.gmra.mxu0 %v1713
        %v1921 = vpop.f32.mrf.mxu0
        %v1922 = vadd.f32 0.0, %v1921
        %1923 = vmatmul.f32.gmra.mxu0 %v1716
        %v1924 = vpop.f32.mrf.mxu0
        %v1925 = vadd.f32 0.0, %v1924
        %1926 = vmatmul.f32.gmra.mxu0 %v1719
        %v1927 = vpop.f32.mrf.mxu0
        %v1928 = vadd.f32 0.0, %v1927
        %1929 = vmatmul.f32.gmra.mxu0 %v1722
        %v1930 = vpop.f32.mrf.mxu0
        %v1931 = vadd.f32 0.0, %v1930
        %1932 = vmatmul.f32.gmra.mxu0 %v1725
        %v1933 = vpop.f32.mrf.mxu0
        %v1934 = vadd.f32 0.0, %v1933
        %1935 = vmatmul.f32.gmra.mxu0 %v1728
        %v1936 = vpop.f32.mrf.mxu0
        %v1937 = vadd.f32 0.0, %v1936
        %1938 = vmatmul.f32.gmra.mxu0 %v1731
        %v1939 = vpop.f32.mrf.mxu0
        %v1940 = vadd.f32 0.0, %v1939
        %1941 = vmatmul.f32.gmra.mxu0 %v1734
        %v1942 = vpop.f32.mrf.mxu0
        %v1943 = vadd.f32 0.0, %v1942
        %1944 = vmatmul.f32.gmra.mxu0 %v1737
        %v1945 = vpop.f32.mrf.mxu0
        %v1946 = vadd.f32 0.0, %v1945
        %1947 = vmatmul.f32.gmra.mxu0 %v1740
        %v1948 = vpop.f32.mrf.mxu0
        %v1949 = vadd.f32 0.0, %v1948
        %1950 = vmatmul.f32.gmra.mxu0 %v1743
        %v1951 = vpop.f32.mrf.mxu0
        %v1952 = vadd.f32 0.0, %v1951
        %1953 = vmatmul.f32.gmra.mxu0 %v1746
        %v1954 = vpop.f32.mrf.mxu0
        %v1955 = vadd.f32 0.0, %v1954
        %1956 = vmatmul.f32.gmra.mxu0 %v1749
        %v1957 = vpop.f32.mrf.mxu0
        %v1958 = vadd.f32 0.0, %v1957
        %1959 = vmatmul.f32.gmra.mxu0 %v1752
        %v1960 = vpop.f32.mrf.mxu0
        %v1961 = vadd.f32 0.0, %v1960
        %1962 = vmatmul.f32.gmra.mxu0 %v1755
        %v1963 = vpop.f32.mrf.mxu0
        %v1964 = vadd.f32 0.0, %v1963
        %1965 = vmatmul.f32.gmra.mxu0 %v1758
        %v1966 = vpop.f32.mrf.mxu0
        %v1967 = vadd.f32 0.0, %v1966
        %1968 = vmatmul.f32.gmra.mxu0 %v1761
        %v1969 = vpop.f32.mrf.mxu0
        %v1970 = vadd.f32 0.0, %v1969
        %1971 = vmatmul.f32.gmra.mxu0 %v1764
        %v1972 = vpop.f32.mrf.mxu0
        %v1973 = vadd.f32 0.0, %v1972
        %1974 = vmatmul.f32.gmra.mxu0 %v1767
        %v1975 = vpop.f32.mrf.mxu0
        %v1976 = vadd.f32 0.0, %v1975
        %1977 = vmatmul.f32.gmra.mxu0 %v1770
        %v1978 = vpop.f32.mrf.mxu0
        %v1979 = vadd.f32 0.0, %v1978
        %1980 = vmatmul.f32.gmra.mxu0 %v1773
        %v1981 = vpop.f32.mrf.mxu0
        %v1982 = vadd.f32 0.0, %v1981
        %1983 = vmatmul.f32.gmra.mxu0 %v1776
        %v1984 = vpop.f32.mrf.mxu0
        %v1985 = vadd.f32 0.0, %v1984
        %1986 = vmatmul.f32.gmra.mxu0 %v1779
        %v1987 = vpop.f32.mrf.mxu0
        %v1988 = vadd.f32 0.0, %v1987
        %1989 = vmatmul.f32.gmra.mxu0 %v1782
        %v1990 = vpop.f32.mrf.mxu0
        %v1991 = vadd.f32 0.0, %v1990
        %1992 = vmatmul.f32.gmra.mxu0 %v1785
        %v1993 = vpop.f32.mrf.mxu0
        %v1994 = vadd.f32 0.0, %v1993
        %1995 = vmatmul.f32.gmra.mxu0 %v1788
        %v1996 = vpop.f32.mrf.mxu0
        %v1997 = vadd.f32 0.0, %v1996
        %1998 = vmatmul.f32.gmra.mxu0 %v1791
        %v1999 = vpop.f32.mrf.mxu0
        %v2000 = vadd.f32 0.0, %v1999
        %2001 = vmatmul.f32.gmra.mxu0 %v1794
        %v2002 = vpop.f32.mrf.mxu0
        %v2003 = vadd.f32 0.0, %v2002
        %2004 = vmatmul.f32.gmra.mxu0 %v1797
        %v2005 = vpop.f32.mrf.mxu0
        %v2006 = vadd.f32 0.0, %v2005
        %2007 = vmatmul.f32.gmra.mxu0 %v1800
        %v2008 = vpop.f32.mrf.mxu0
        %v2009 = vadd.f32 0.0, %v2008
        %2010 = vmatmul.f32.gmra.mxu0 %v1803
        %v2011 = vpop.f32.mrf.mxu0
        %v2012 = vadd.f32 0.0, %v2011
        %2013 = vmatmul.f32.gmra.mxu0 %v1806
        %v2014 = vpop.f32.mrf.mxu0
        %v2015 = vadd.f32 0.0, %v2014
        %2016 = vmatmul.f32.gmra.mxu0 %v1809
        %v2017 = vpop.f32.mrf.mxu0
        %v2018 = vadd.f32 0.0, %v2017
        %2019 = vmatmul.f32.gmra.mxu0 %v1812
        %v2020 = vpop.f32.mrf.mxu0
        %v2021 = vadd.f32 0.0, %v2020
        %2022 = vdwg.mxu0
        %v2023 = vadd.f32 %v1301, %v1832
        %v2024 = vadd.f32 %v1304, %v1835
        %v2025 = vadd.f32 %v1307, %v1838
        %v2026 = vadd.f32 %v1310, %v1841
        %v2027 = vadd.f32 %v1313, %v1844
        %v2028 = vadd.f32 %v1316, %v1847
        %v2029 = vadd.f32 %v1319, %v1850
        %v2030 = vadd.f32 %v1322, %v1853
        %v2031 = vadd.f32 %v1325, %v1856
        %v2032 = vadd.f32 %v1328, %v1859
        %v2033 = vadd.f32 %v1331, %v1862
        %v2034 = vadd.f32 %v1334, %v1865
        %v2035 = vadd.f32 %v1337, %v1868
        %v2036 = vadd.f32 %v1340, %v1871
        %v2037 = vadd.f32 %v1343, %v1874
        %v2038 = vadd.f32 %v1346, %v1877
        %v2039 = vadd.f32 %v1349, %v1880
        %v2040 = vadd.f32 %v1352, %v1883
        %v2041 = vadd.f32 %v1355, %v1886
        %v2042 = vadd.f32 %v1358, %v1889
        %v2043 = vadd.f32 %v1361, %v1892
        %v2044 = vadd.f32 %v1364, %v1895
        %v2045 = vadd.f32 %v1367, %v1898
        %v2046 = vadd.f32 %v1370, %v1901
        %v2047 = vadd.f32 %v1373, %v1904
        %v2048 = vadd.f32 %v1376, %v1907
        %v2049 = vadd.f32 %v1379, %v1910
        %v2050 = vadd.f32 %v1382, %v1913
        %v2051 = vadd.f32 %v1385, %v1916
        %v2052 = vadd.f32 %v1388, %v1919
        %v2053 = vadd.f32 %v1391, %v1922
        %v2054 = vadd.f32 %v1394, %v1925
        %v2055 = vadd.f32 %v1397, %v1928
        %v2056 = vadd.f32 %v1400, %v1931
        %v2057 = vadd.f32 %v1403, %v1934
        %v2058 = vadd.f32 %v1406, %v1937
        %v2059 = vadd.f32 %v1409, %v1940
        %v2060 = vadd.f32 %v1412, %v1943
        %v2061 = vadd.f32 %v1415, %v1946
        %v2062 = vadd.f32 %v1418, %v1949
        %v2063 = vadd.f32 %v1421, %v1952
        %v2064 = vadd.f32 %v1424, %v1955
        %v2065 = vadd.f32 %v1427, %v1958
        %v2066 = vadd.f32 %v1430, %v1961
        %v2067 = vadd.f32 %v1433, %v1964
        %v2068 = vadd.f32 %v1436, %v1967
        %v2069 = vadd.f32 %v1439, %v1970
        %v2070 = vadd.f32 %v1442, %v1973
        %v2071 = vadd.f32 %v1445, %v1976
        %v2072 = vadd.f32 %v1448, %v1979
        %v2073 = vadd.f32 %v1451, %v1982
        %v2074 = vadd.f32 %v1454, %v1985
        %v2075 = vadd.f32 %v1457, %v1988
        %v2076 = vadd.f32 %v1460, %v1991
        %v2077 = vadd.f32 %v1463, %v1994
        %v2078 = vadd.f32 %v1466, %v1997
        %v2079 = vadd.f32 %v1469, %v2000
        %v2080 = vadd.f32 %v1472, %v2003
        %v2081 = vadd.f32 %v1475, %v2006
        %v2082 = vadd.f32 %v1478, %v2009
        %v2083 = vadd.f32 %v1481, %v2012
        %v2084 = vadd.f32 %v1484, %v2015
        %v2085 = vadd.f32 %v1487, %v2018
        %v2086 = vadd.f32 %v1490, %v2021
        %v2087 = vld [vmem:[%s7] sm:$0x1]
        %v2089 = vperm.slane %v2087, 0
        %v2091 = vadd.f32 %v2023, %v2089
        %v2092 = vadd.f32 %v2024, %v2089
        %v2093 = vadd.f32 %v2025, %v2089
        %v2094 = vadd.f32 %v2026, %v2089
        %v2095 = vadd.f32 %v2027, %v2089
        %v2096 = vadd.f32 %v2028, %v2089
        %v2097 = vadd.f32 %v2029, %v2089
        %v2098 = vadd.f32 %v2030, %v2089
        %v2099 = vadd.f32 %v2031, %v2089
        %v2100 = vadd.f32 %v2032, %v2089
        %v2101 = vadd.f32 %v2033, %v2089
        %v2102 = vadd.f32 %v2034, %v2089
        %v2103 = vadd.f32 %v2035, %v2089
        %v2104 = vadd.f32 %v2036, %v2089
        %v2105 = vadd.f32 %v2037, %v2089
        %v2106 = vadd.f32 %v2038, %v2089
        %v2107 = vadd.f32 %v2039, %v2089
        %v2108 = vadd.f32 %v2040, %v2089
        %v2109 = vadd.f32 %v2041, %v2089
        %v2110 = vadd.f32 %v2042, %v2089
        %v2111 = vadd.f32 %v2043, %v2089
        %v2112 = vadd.f32 %v2044, %v2089
        %v2113 = vadd.f32 %v2045, %v2089
        %v2114 = vadd.f32 %v2046, %v2089
        %v2115 = vadd.f32 %v2047, %v2089
        %v2116 = vadd.f32 %v2048, %v2089
        %v2117 = vadd.f32 %v2049, %v2089
        %v2118 = vadd.f32 %v2050, %v2089
        %v2119 = vadd.f32 %v2051, %v2089
        %v2120 = vadd.f32 %v2052, %v2089
        %v2121 = vadd.f32 %v2053, %v2089
        %v2122 = vadd.f32 %v2054, %v2089
        %v2123 = vadd.f32 %v2055, %v2089
        %v2124 = vadd.f32 %v2056, %v2089
        %v2125 = vadd.f32 %v2057, %v2089
        %v2126 = vadd.f32 %v2058, %v2089
        %v2127 = vadd.f32 %v2059, %v2089
        %v2128 = vadd.f32 %v2060, %v2089
        %v2129 = vadd.f32 %v2061, %v2089
        %v2130 = vadd.f32 %v2062, %v2089
        %v2131 = vadd.f32 %v2063, %v2089
        %v2132 = vadd.f32 %v2064, %v2089
        %v2133 = vadd.f32 %v2065, %v2089
        %v2134 = vadd.f32 %v2066, %v2089
        %v2135 = vadd.f32 %v2067, %v2089
        %v2136 = vadd.f32 %v2068, %v2089
        %v2137 = vadd.f32 %v2069, %v2089
        %v2138 = vadd.f32 %v2070, %v2089
        %v2139 = vadd.f32 %v2071, %v2089
        %v2140 = vadd.f32 %v2072, %v2089
        %v2141 = vadd.f32 %v2073, %v2089
        %v2142 = vadd.f32 %v2074, %v2089
        %v2143 = vadd.f32 %v2075, %v2089
        %v2144 = vadd.f32 %v2076, %v2089
        %v2145 = vadd.f32 %v2077, %v2089
        %v2146 = vadd.f32 %v2078, %v2089
        %v2147 = vadd.f32 %v2079, %v2089
        %v2148 = vadd.f32 %v2080, %v2089
        %v2149 = vadd.f32 %v2081, %v2089
        %v2150 = vadd.f32 %v2082, %v2089
        %v2151 = vadd.f32 %v2083, %v2089
        %v2152 = vadd.f32 %v2084, %v2089
        %v2153 = vadd.f32 %v2085, %v2089
        %v2154 = vadd.f32 %v2086, %v2089
        %v2155 = vmax.f32 %v2091, 0.0
        %v2156 = vmax.f32 %v2092, 0.0
        %v2157 = vmax.f32 %v2093, 0.0
        %v2158 = vmax.f32 %v2094, 0.0
        %v2159 = vmax.f32 %v2095, 0.0
        %v2160 = vmax.f32 %v2096, 0.0
        %v2161 = vmax.f32 %v2097, 0.0
        %v2162 = vmax.f32 %v2098, 0.0
        %v2163 = vmax.f32 %v2099, 0.0
        %v2164 = vmax.f32 %v2100, 0.0
        %v2165 = vmax.f32 %v2101, 0.0
        %v2166 = vmax.f32 %v2102, 0.0
        %v2167 = vmax.f32 %v2103, 0.0
        %v2168 = vmax.f32 %v2104, 0.0
        %v2169 = vmax.f32 %v2105, 0.0
        %v2170 = vmax.f32 %v2106, 0.0
        %v2171 = vmax.f32 %v2107, 0.0
        %v2172 = vmax.f32 %v2108, 0.0
        %v2173 = vmax.f32 %v2109, 0.0
        %v2174 = vmax.f32 %v2110, 0.0
        %v2175 = vmax.f32 %v2111, 0.0
        %v2176 = vmax.f32 %v2112, 0.0
        %v2177 = vmax.f32 %v2113, 0.0
        %v2178 = vmax.f32 %v2114, 0.0
        %v2179 = vmax.f32 %v2115, 0.0
        %v2180 = vmax.f32 %v2116, 0.0
        %v2181 = vmax.f32 %v2117, 0.0
        %v2182 = vmax.f32 %v2118, 0.0
        %v2183 = vmax.f32 %v2119, 0.0
        %v2184 = vmax.f32 %v2120, 0.0
        %v2185 = vmax.f32 %v2121, 0.0
        %v2186 = vmax.f32 %v2122, 0.0
        %v2187 = vmax.f32 %v2123, 0.0
        %v2188 = vmax.f32 %v2124, 0.0
        %v2189 = vmax.f32 %v2125, 0.0
        %v2190 = vmax.f32 %v2126, 0.0
        %v2191 = vmax.f32 %v2127, 0.0
        %v2192 = vmax.f32 %v2128, 0.0
        %v2193 = vmax.f32 %v2129, 0.0
        %v2194 = vmax.f32 %v2130, 0.0
        %v2195 = vmax.f32 %v2131, 0.0
        %v2196 = vmax.f32 %v2132, 0.0
        %v2197 = vmax.f32 %v2133, 0.0
        %v2198 = vmax.f32 %v2134, 0.0
        %v2199 = vmax.f32 %v2135, 0.0
        %v2200 = vmax.f32 %v2136, 0.0
        %v2201 = vmax.f32 %v2137, 0.0
        %v2202 = vmax.f32 %v2138, 0.0
        %v2203 = vmax.f32 %v2139, 0.0
        %v2204 = vmax.f32 %v2140, 0.0
        %v2205 = vmax.f32 %v2141, 0.0
        %v2206 = vmax.f32 %v2142, 0.0
        %v2207 = vmax.f32 %v2143, 0.0
        %v2208 = vmax.f32 %v2144, 0.0
        %v2209 = vmax.f32 %v2145, 0.0
        %v2210 = vmax.f32 %v2146, 0.0
        %v2211 = vmax.f32 %v2147, 0.0
        %v2212 = vmax.f32 %v2148, 0.0
        %v2213 = vmax.f32 %v2149, 0.0
        %v2214 = vmax.f32 %v2150, 0.0
        %v2215 = vmax.f32 %v2151, 0.0
        %v2216 = vmax.f32 %v2152, 0.0
        %v2217 = vmax.f32 %v2153, 0.0
        %v2218 = vmax.f32 %v2154, 0.0
        %2219 = vst [vmem:[%s520] sm:$0xff] %v2155
        %2220 = vst [vmem:[%s520 + $0x8] sm:$0xff] %v2156
        %2221 = vst [vmem:[%s520 + $0x10] sm:$0xff] %v2157
        %2222 = vst [vmem:[%s520 + $0x18] sm:$0xff] %v2158
        %2223 = vst [vmem:[%s520 + $0x20] sm:$0xff] %v2159
        %2224 = vst [vmem:[%s520 + $0x28] sm:$0xff] %v2160
        %2225 = vst [vmem:[%s520 + $0x30] sm:$0xff] %v2161
        %2226 = vst [vmem:[%s520 + $0x38] sm:$0xff] %v2162
        %2227 = vst [vmem:[%s520 + $0x40] sm:$0xff] %v2163
        %2228 = vst [vmem:[%s520 + $0x48] sm:$0xff] %v2164
        %2229 = vst [vmem:[%s520 + $0x50] sm:$0xff] %v2165
        %2230 = vst [vmem:[%s520 + $0x58] sm:$0xff] %v2166
        %2231 = vst [vmem:[%s520 + $0x60] sm:$0xff] %v2167
        %2232 = vst [vmem:[%s520 + $0x68] sm:$0xff] %v2168
        %2233 = vst [vmem:[%s520 + $0x70] sm:$0xff] %v2169
        %2234 = vst [vmem:[%s520 + $0x78] sm:$0xff] %v2170
        %2235 = vst [vmem:[%s520 + $0x80] sm:$0xff] %v2171
        %2236 = vst [vmem:[%s520 + $0x88] sm:$0xff] %v2172
        %2237 = vst [vmem:[%s520 + $0x90] sm:$0xff] %v2173
        %2238 = vst [vmem:[%s520 + $0x98] sm:$0xff] %v2174
        %2239 = vst [vmem:[%s520 + $0xa0] sm:$0xff] %v2175
        %2240 = vst [vmem:[%s520 + $0xa8] sm:$0xff] %v2176
        %2241 = vst [vmem:[%s520 + $0xb0] sm:$0xff] %v2177
        %2242 = vst [vmem:[%s520 + $0xb8] sm:$0xff] %v2178
        %2243 = vst [vmem:[%s520 + $0xc0] sm:$0xff] %v2179
        %2244 = vst [vmem:[%s520 + $0xc8] sm:$0xff] %v2180
        %2245 = vst [vmem:[%s520 + $0xd0] sm:$0xff] %v2181
        %2246 = vst [vmem:[%s520 + $0xd8] sm:$0xff] %v2182
        %2247 = vst [vmem:[%s520 + $0xe0] sm:$0xff] %v2183
        %2248 = vst [vmem:[%s520 + $0xe8] sm:$0xff] %v2184
        %2249 = vst [vmem:[%s520 + $0xf0] sm:$0xff] %v2185
        %2250 = vst [vmem:[%s520 + $0xf8] sm:$0xff] %v2186
        %2251 = vst [vmem:[%s520 + $0x100] sm:$0xff] %v2187
        %2252 = vst [vmem:[%s520 + $0x108] sm:$0xff] %v2188
        %2253 = vst [vmem:[%s520 + $0x110] sm:$0xff] %v2189
        %2254 = vst [vmem:[%s520 + $0x118] sm:$0xff] %v2190
        %2255 = vst [vmem:[%s520 + $0x120] sm:$0xff] %v2191
        %2256 = vst [vmem:[%s520 + $0x128] sm:$0xff] %v2192
        %2257 = vst [vmem:[%s520 + $0x130] sm:$0xff] %v2193
        %2258 = vst [vmem:[%s520 + $0x138] sm:$0xff] %v2194
        %2259 = vst [vmem:[%s520 + $0x140] sm:$0xff] %v2195
        %2260 = vst [vmem:[%s520 + $0x148] sm:$0xff] %v2196
        %2261 = vst [vmem:[%s520 + $0x150] sm:$0xff] %v2197
        %2262 = vst [vmem:[%s520 + $0x158] sm:$0xff] %v2198
        %2263 = vst [vmem:[%s520 + $0x160] sm:$0xff] %v2199
        %2264 = vst [vmem:[%s520 + $0x168] sm:$0xff] %v2200
        %2265 = vst [vmem:[%s520 + $0x170] sm:$0xff] %v2201
        %2266 = vst [vmem:[%s520 + $0x178] sm:$0xff] %v2202
        %2267 = vst [vmem:[%s520 + $0x180] sm:$0xff] %v2203
        %2268 = vst [vmem:[%s520 + $0x188] sm:$0xff] %v2204
        %2269 = vst [vmem:[%s520 + $0x190] sm:$0xff] %v2205
        %2270 = vst [vmem:[%s520 + $0x198] sm:$0xff] %v2206
        %2271 = vst [vmem:[%s520 + $0x1a0] sm:$0xff] %v2207
        %2272 = vst [vmem:[%s520 + $0x1a8] sm:$0xff] %v2208
        %2273 = vst [vmem:[%s520 + $0x1b0] sm:$0xff] %v2209
        %2274 = vst [vmem:[%s520 + $0x1b8] sm:$0xff] %v2210
        %2275 = vst [vmem:[%s520 + $0x1c0] sm:$0xff] %v2211
        %2276 = vst [vmem:[%s520 + $0x1c8] sm:$0xff] %v2212
        %2277 = vst [vmem:[%s520 + $0x1d0] sm:$0xff] %v2213
        %2278 = vst [vmem:[%s520 + $0x1d8] sm:$0xff] %v2214
        %2279 = vst [vmem:[%s520 + $0x1e0] sm:$0xff] %v2215
        %2280 = vst [vmem:[%s520 + $0x1e8] sm:$0xff] %v2216
        %2281 = vst [vmem:[%s520 + $0x1f0] sm:$0xff] %v2217
        %2282 = vst [vmem:[%s520 + $0x1f8] sm:$0xff] %v2218
        %v2283 = vld [vmem:[%s527] sm:$0xff]
        %v2284 = vld [vmem:[%s527 + $0x8] sm:$0xff]
        %2285 = vmatpush.msra.mxu0 %v2170
        %2286 = vmatpush.msra.mxu0 %v2169
        %2287 = vmatpush.msra.mxu0 %v2168
        %2288 = vmatpush.msra.mxu0 %v2167
        %2289 = vmatpush.msra.mxu0 %v2166
        %2290 = vmatpush.msra.mxu0 %v2165
        %2291 = vmatpush.msra.mxu0 %v2164
        %2292 = vmatpush.msra.mxu0 %v2163
        %2293 = vmatpush.msra.mxu0 %v2162
        %2294 = vmatpush.msra.mxu0 %v2161
        %2295 = vmatpush.msra.mxu0 %v2160
        %2296 = vmatpush.msra.mxu0 %v2159
        %2297 = vmatpush.msra.mxu0 %v2158
        %2298 = vmatpush.msra.mxu0 %v2157
        %2299 = vmatpush.msra.mxu0 %v2156
        %2300 = vmatpush.msra.mxu0 %v2155
        %2301 = vmatmul.f32.gmra.mxu0 %v642
        %v2302 = vpop.f32.mrf.mxu0
        %v2303 = vadd.f32 0.0, %v2302
        %2304 = vmatmul.f32.gmra.mxu0 %v646
        %v2305 = vpop.f32.mrf.mxu0
        %v2306 = vadd.f32 0.0, %v2305
        %2307 = vdwg.mxu0
        %2308 = vmatpush.msra.mxu0 %v2186
        %2309 = vmatpush.msra.mxu0 %v2185
        %2310 = vmatpush.msra.mxu0 %v2184
        %2311 = vmatpush.msra.mxu0 %v2183
        %2312 = vmatpush.msra.mxu0 %v2182
        %2313 = vmatpush.msra.mxu0 %v2181
        %2314 = vmatpush.msra.mxu0 %v2180
        %2315 = vmatpush.msra.mxu0 %v2179
        %2316 = vmatpush.msra.mxu0 %v2178
        %2317 = vmatpush.msra.mxu0 %v2177
        %2318 = vmatpush.msra.mxu0 %v2176
        %2319 = vmatpush.msra.mxu0 %v2175
        %2320 = vmatpush.msra.mxu0 %v2174
        %2321 = vmatpush.msra.mxu0 %v2173
        %2322 = vmatpush.msra.mxu0 %v2172
        %2323 = vmatpush.msra.mxu0 %v2171
        %2324 = vmatmul.f32.gmra.mxu0 %v643
        %v2325 = vpop.f32.mrf.mxu0
        %v2326 = vadd.f32 %v2303, %v2325
        %2327 = vmatmul.f32.gmra.mxu0 %v647
        %v2328 = vpop.f32.mrf.mxu0
        %v2329 = vadd.f32 %v2306, %v2328
        %2330 = vdwg.mxu0
        %2331 = vmatpush.msra.mxu0 %v2202
        %2332 = vmatpush.msra.mxu0 %v2201
        %2333 = vmatpush.msra.mxu0 %v2200
        %2334 = vmatpush.msra.mxu0 %v2199
        %2335 = vmatpush.msra.mxu0 %v2198
        %2336 = vmatpush.msra.mxu0 %v2197
        %2337 = vmatpush.msra.mxu0 %v2196
        %2338 = vmatpush.msra.mxu0 %v2195
        %2339 = vmatpush.msra.mxu0 %v2194
        %2340 = vmatpush.msra.mxu0 %v2193
        %2341 = vmatpush.msra.mxu0 %v2192
        %2342 = vmatpush.msra.mxu0 %v2191
        %2343 = vmatpush.msra.mxu0 %v2190
        %2344 = vmatpush.msra.mxu0 %v2189
        %2345 = vmatpush.msra.mxu0 %v2188
        %2346 = vmatpush.msra.mxu0 %v2187
        %2347 = vmatmul.f32.gmra.mxu0 %v644
        %v2348 = vpop.f32.mrf.mxu0
        %v2349 = vadd.f32 %v2326, %v2348
        %2350 = vmatmul.f32.gmra.mxu0 %v648
        %v2351 = vpop.f32.mrf.mxu0
        %v2352 = vadd.f32 %v2329, %v2351
        %2353 = vdwg.mxu0
        %2354 = vmatpush.msra.mxu0 %v2218
        %2355 = vmatpush.msra.mxu0 %v2217
        %2356 = vmatpush.msra.mxu0 %v2216
        %2357 = vmatpush.msra.mxu0 %v2215
        %2358 = vmatpush.msra.mxu0 %v2214
        %2359 = vmatpush.msra.mxu0 %v2213
        %2360 = vmatpush.msra.mxu0 %v2212
        %2361 = vmatpush.msra.mxu0 %v2211
        %2362 = vmatpush.msra.mxu0 %v2210
        %2363 = vmatpush.msra.mxu0 %v2209
        %2364 = vmatpush.msra.mxu0 %v2208
        %2365 = vmatpush.msra.mxu0 %v2207
        %2366 = vmatpush.msra.mxu0 %v2206
        %2367 = vmatpush.msra.mxu0 %v2205
        %2368 = vmatpush.msra.mxu0 %v2204
        %2369 = vmatpush.msra.mxu0 %v2203
        %2370 = vmatmul.f32.gmra.mxu0 %v645
        %v2371 = vpop.f32.mrf.mxu0
        %v2372 = vadd.f32 %v2349, %v2371
        %2373 = vmatmul.f32.gmra.mxu0 %v649
        %v2374 = vpop.f32.mrf.mxu0
        %v2375 = vadd.f32 %v2352, %v2374
        %2376 = vdwg.mxu0
        %v2377 = vadd.f32 %v2283, %v2372
        %v2378 = vadd.f32 %v2284, %v2375
        %2379 = vst [vmem:[%s527] sm:$0xff] %v2377
        %2380 = vst [vmem:[%s527 + $0x8] sm:$0xff] %v2378
        %s2381 = sand.u32 %s246, 1
        %s2382 = scalar_lea.sflag [#allocation6], %s2381
        %s2383 = sand.u32 %s246, 1
        %s2384 = smul.addr %s2383, 512
        %s2385 = scalar_lea.vmem [#allocation16], %s2384
        %s2386 = sand.u32 %s272, 1
        %s2387 = scalar_lea.sflag [#allocation18], %s2386
        %s2388 = sand.u32 %s272, 1
        %s2389 = smul.addr %s2388, 16
        %s2390 = scalar_lea.vmem [#allocation17], %s2389
        // Predicated region
        $region85: #{tpu_custom_call.1} parent=51 // pred_check
          %p2391 = pneg %p256
        $region86: #{tpu_custom_call.1} parent=51 // pred_check_branch
          %2393 = sbr.rel (%p2391) target = $region88
        $region87: #{tpu_custom_call.1} parent=51 // pred_region
          %s2394 = sadd.s32 %s39, %s40
          %s2395 = smul.u32 64, %s2394
          %2397 = vsyncadd %s2382, 0
          %s2398 = smul.addr %s2395, 8
          %s2399 = scalar_lea.hbm %s8, %s2398
          %s2400 = sshll.u32 %s2385, 4
          %s2401 = int_to_ptr.vmem [resolvable:$true] %s2400
          %s2402 = sshll.u32 %s2399, 4
          %s2403 = int_to_ptr.hbm [resolvable:$true] %s2402
          %2408 = dma.vmem_to_hbm [thread:$0]  %s2401, 8192, %s2403, %s2382, 128, 128, 8
        $region88: #{tpu_custom_call.1} parent=51 // pred_fallthru
          _
        // Predicated region
        $region89: #{tpu_custom_call.1} parent=51 // pred_check
          %p2409 = pneg %p282
        $region90: #{tpu_custom_call.1} parent=51 // pred_check_branch
          %2411 = sbr.rel (%p2409) target = $region92
        $region91: #{tpu_custom_call.1} parent=51 // pred_region
          %2413 = vsyncadd %s2387, 0
          %s2414 = smul.addr %s39, 2
          %s2415 = smul.addr %s2414, 8
          %s2416 = scalar_lea.hbm %s9, %s2415
          %s2417 = sshll.u32 %s2390, 4
          %s2418 = int_to_ptr.vmem [resolvable:$true] %s2417
          %s2419 = sshll.u32 %s2416, 4
          %s2420 = int_to_ptr.hbm [resolvable:$true] %s2419
          %2425 = dma.vmem_to_hbm [thread:$0]  %s2418, 256, %s2420, %s2387, 128, 128, 8
        $region92: #{tpu_custom_call.1} parent=51 // pred_fallthru
          _
      $region52: #{tpu_custom_call.1} parent=5 // pred_fallthru
        _
      %p2426 = scmp.le.s32.totalorder 2, %s30
      // Predicated region
      $region93: #{tpu_custom_call.1} parent=5 // pred_check
        %p2427 = pneg %p2426
      $region94: #{tpu_custom_call.1} parent=5 // pred_check_branch
        %2429 = sbr.rel (%p2427) target = $region96
      $region95: #{tpu_custom_call.1} parent=5 // pred_region
        %s2430 = ssub.s32 %s30, 2
        // Predicated region
        $region97: #{tpu_custom_call.1} parent=95 // pred_check
          %p2431 = pneg %p262
        $region98: #{tpu_custom_call.1} parent=95 // pred_check_branch
          %2433 = sbr.rel (%p2431) target = $region100
        $region99: #{tpu_custom_call.1} parent=95 // pred_region
          %s2434 = sand.u32 %s247, 1
          %s2435 = scalar_lea.sflag [#allocation6], %s2434
          %s2436 = sand.u32 %s247, 1
          %s2437 = smul.addr %s2436, 512
          %s2438 = scalar_lea.vmem [#allocation16], %s2437
          %2440 = dma.done %s2435, 8192
        $region100: #{tpu_custom_call.1} parent=95 // pred_fallthru
          _
        // Predicated region
        $region101: #{tpu_custom_call.1} parent=95 // pred_check
          %p2441 = pneg %p288
        $region102: #{tpu_custom_call.1} parent=95 // pred_check_branch
          %2443 = sbr.rel (%p2441) target = $region104
        $region103: #{tpu_custom_call.1} parent=95 // pred_region
          %s2444 = sand.u32 %s273, 1
          %s2445 = scalar_lea.sflag [#allocation18], %s2444
          %s2446 = sand.u32 %s273, 1
          %s2447 = smul.addr %s2446, 16
          %s2448 = scalar_lea.vmem [#allocation17], %s2447
          %2450 = dma.done %s2445, 256
        $region104: #{tpu_custom_call.1} parent=95 // pred_fallthru
          _
      $region96: #{tpu_custom_call.1} parent=5 // pred_fallthru
        _
    $region6: #{tpu_custom_call.1} parent=1 // loop_footer
      %s34 = sadd.s32 1, %s30
    $region7: #{tpu_custom_call.1} parent=1 // loop_footer_branch
      %29 = sbr.rel target = $region3
    $region8: #{tpu_custom_call.1} parent=1 // loop_exit
      _
    %2451 = vsyncpa [#allocation5], 1
    %s2452 = scalar_lea.sflag [#allocation5], 1
    %2453 = vsyncpa %s2452, 1
    %2454 = vsyncpa [#allocation8], 1
    %s2455 = scalar_lea.sflag [#allocation8], 1
    %2456 = vsyncpa %s2455, 1
    %2457 = vsyncpa [#allocation11], 1
    %2458 = vsyncpa [#allocation14], 1
    %2459 = vsyncpa [#allocation6], 1
    %s2460 = scalar_lea.sflag [#allocation6], 1
    %2461 = vsyncpa %s2460, 1
    %2462 = vsyncpa [#allocation18], 1
    %s2463 = scalar_lea.sflag [#allocation18], 1
    %2464 = vsyncpa %s2463, 1

</llo_original>
